<compile_context>
chip_gen: v7x
topology: tpu7x:2x2x1
jax: 0.10.0
libtpu: 0.0.40
codegen_flags: <defaults>
</compile_context>

<pallas_src>
import functools

import jax
import jax.numpy as jnp
from jax.experimental import pallas as pl
from jax.experimental.pallas import tpu as pltpu


def _round_up(x: int, m: int) -> int:
    return (x + m - 1) // m * m


# ----------------------------------------------------------------------------
# Fused Generator kernel: one M-tile per grid step, weights VMEM-resident.
# ----------------------------------------------------------------------------
def _generator_kernel(z_ref,
                      w1_ref, b1_ref,
                      w2_ref, b2_ref,
                      w3_ref, b3_ref,
                      w4_ref, b4_ref,
                      o_ref, *, alpha):
    """out = tanh(leaky(leaky(leaky(z@W1+b1)@W2+b2)@W3+b3)@W4+b4)."""

    def leaky(y):
        return jnp.where(y > 0, y, alpha * y)

    # Matmul operands stream in the (possibly bf16) compute dtype; every dot
    # accumulates in f32 on the MXU.  Post-matmul math stays in f32.
    h = leaky(
        jnp.dot(z_ref[...], w1_ref[...], preferred_element_type=jnp.float32)
        + b1_ref[...]
    )
    h = leaky(
        jnp.dot(h.astype(w2_ref.dtype), w2_ref[...],
                preferred_element_type=jnp.float32)
        + b2_ref[...]
    )
    h = leaky(
        jnp.dot(h.astype(w3_ref.dtype), w3_ref[...],
                preferred_element_type=jnp.float32)
        + b3_ref[...]
    )
    y = (
        jnp.dot(h.astype(w4_ref.dtype), w4_ref[...],
                preferred_element_type=jnp.float32)
        + b4_ref[...]
    )
    o_ref[...] = jnp.tanh(y).astype(o_ref.dtype)


def generator_forward(z, params, *, tile_m=256, compute_dtype=jnp.bfloat16):
    """Forward pass of the Generator. z: [batch, input_dim]."""
    (w1, b1), (w2, b2), (w3, b3), (w4, b4) = params
    out_dtype = z.dtype
    M, K = z.shape
    d1, d2, d3, N = w1.shape[1], w2.shape[1], w3.shape[1], w4.shape[1]

    # --- padding: lane-dense output N, tile-aligned batch M ------------------
    N_pad = _round_up(N, 128)
    if M >= tile_m:
        tm = tile_m
    else:
        tm = _round_up(max(M, 16), 16)      # 16: safe for bf16 sublane packing
    M_pad = _round_up(M, tm)

    if M_pad != M:
        z = jnp.pad(z, ((0, M_pad - M), (0, 0)))
    if N_pad != N:
        w4 = jnp.pad(w4, ((0, 0), (0, N_pad - N)))
        b4 = jnp.pad(b4, (0, N_pad - N))

    # --- dtype prep: bf16 streaming for matmul operands, f32 biases ----------
    z_c = z.astype(compute_dtype)
    w1c = w1.astype(compute_dtype)
    w2c = w2.astype(compute_dtype)
    w3c = w3.astype(compute_dtype)
    w4c = w4.astype(compute_dtype)
    b1r = b1.reshape(1, -1).astype(jnp.float32)
    b2r = b2.reshape(1, -1).astype(jnp.float32)
    b3r = b3.reshape(1, -1).astype(jnp.float32)
    b4r = b4.reshape(1, -1).astype(jnp.float32)

    args = (z_c, w1c, b1r, w2c, b2r, w3c, b3r, w4c, b4r)

    grid = (M_pad // tm,)
    const = lambda i: (0, 0)               # weights/biases: one DMA, then resident
    in_specs = [
        pl.BlockSpec((tm, K), lambda i: (i, 0)),
        pl.BlockSpec(w1c.shape, const), pl.BlockSpec(b1r.shape, const),
        pl.BlockSpec(w2c.shape, const), pl.BlockSpec(b2r.shape, const),
        pl.BlockSpec(w3c.shape, const), pl.BlockSpec(b3r.shape, const),
        pl.BlockSpec(w4c.shape, const), pl.BlockSpec(b4r.shape, const),
    ]
    out_spec = pl.BlockSpec((tm, N_pad), lambda i: (i, 0))

    flops = 2 * M_pad * (K * d1 + d1 * d2 + d2 * d3 + d3 * N_pad)
    bytes_accessed = int(
        sum(int(a.size) * a.dtype.itemsize for a in args)
        + M_pad * N_pad * jnp.dtype(jnp.float32).itemsize
    )
    cost = pl.CostEstimate(
        flops=int(flops),
        transcendentals=int(M_pad * N_pad),
        bytes_accessed=bytes_accessed,
    )

    out = pl.pallas_call(
        functools.partial(_generator_kernel, alpha=0.2),
        out_shape=jax.ShapeDtypeStruct((M_pad, N_pad), jnp.float32),
        grid=grid,
        in_specs=in_specs,
        out_specs=out_spec,
        compiler_params=pltpu.CompilerParams(
            dimension_semantics=("parallel",)),
        cost_estimate=cost,
    )(*args)

    return out[:M, :N].astype(out_dtype)


# ----------------------------------------------------------------------------
# Generator: parameter init (mimics PyTorch nn.Linear default init)
# ----------------------------------------------------------------------------
def init_generator_params(key, input_dim, output_dim):
    dims = [input_dim, 256, 512, 1024, output_dim]
    params = []
    for i in range(len(dims) - 1):
        fan_in, fan_out = dims[i], dims[i + 1]
        key, kw, kb = jax.random.split(key, 3)
        bound = 1.0 / jnp.sqrt(fan_in)
        w = jax.random.uniform(
            kw, (fan_in, fan_out), jnp.float32, minval=-bound, maxval=bound
        )
        b = jax.random.uniform(
            kb, (fan_out,), jnp.float32, minval=-bound, maxval=bound
        )
        params.append((w, b))
    return params


# ----------------------------------------------------------------------------
# Reference (plain JAX) for a sanity check
# ----------------------------------------------------------------------------
def generator_forward_ref(z, params):
    h = z
    for i, (w, b) in enumerate(params):
        h = h @ w + b
        if i < len(params) - 1:
            h = jnp.where(h > 0, h, 0.2 * h)
        else:
            h = jnp.tanh(h)
    return h


if __name__ == "__main__":
    key = jax.random.PRNGKey(0)
    batch = 8
    input_dim = 64      # latent dimension
    output_dim = 128    # small flattened output (already lane-aligned here)

    kz, kp = jax.random.split(key)
    z = jax.random.normal(kz, (batch, input_dim), dtype=jnp.float32)
    params = init_generator_params(kp, input_dim, output_dim)

    ref = generator_forward_ref(z, params)

    # 1) f32 compute path through the same kernel: tight correctness check.
    out_f32 = generator_forward(z, params, compute_dtype=jnp.float32)
    out_f32 = jax.block_until_ready(out_f32)
    assert out_f32.shape == (batch, output_dim), out_f32.shape
    assert jnp.allclose(out_f32, ref, atol=1e-5, rtol=1e-5), (
        float(jnp.max(jnp.abs(out_f32 - ref)))
    )

    # 2) Default bf16-streaming path: relaxed tolerance (tanh output in [-1,1]).
    out = generator_forward(z, params)
    out = jax.block_until_ready(out)
    assert out.shape == (batch, output_dim), out.shape
    assert jnp.allclose(out, ref, atol=4e-2, rtol=4e-2), (
        float(jnp.max(jnp.abs(out - ref)))
    )

    print("KERNEL_OK")
</pallas_src>

<mosaic_0001>
module attributes {stable_mosaic.version = 11 : i64} {
  func.func @_generator_kernel(%arg0: i32, %arg1: memref<16x64xf32, #tpu.memory_space<vmem>>, %arg2: memref<64x256xf32, #tpu.memory_space<vmem>>, %arg3: memref<1x256xf32, #tpu.memory_space<vmem>>, %arg4: memref<256x512xf32, #tpu.memory_space<vmem>>, %arg5: memref<1x512xf32, #tpu.memory_space<vmem>>, %arg6: memref<512x1024xf32, #tpu.memory_space<vmem>>, %arg7: memref<1x1024xf32, #tpu.memory_space<vmem>>, %arg8: memref<1024x128xf32, #tpu.memory_space<vmem>>, %arg9: memref<1x128xf32, #tpu.memory_space<vmem>>, %arg10: memref<16x128xf32, #tpu.memory_space<vmem>>) attributes {dimension_semantics = [#tpu.dimension_semantics<parallel>], iteration_bounds = array<i64: 1>, scalar_prefetch = 0 : i64, scratch_operands = 0 : i64, tpu.core_type = #tpu.core_type<tc>, window_params = [{transform_indices = @transform_0, window_bounds = array<i64: 16, 64>}, {pipeline_mode = #tpu.pipeline_mode<synchronous>, transform_indices = @transform_1, window_bounds = array<i64: 64, 256>}, {pipeline_mode = #tpu.pipeline_mode<synchronous>, transform_indices = @transform_2, window_bounds = array<i64: 1, 256>}, {pipeline_mode = #tpu.pipeline_mode<synchronous>, transform_indices = @transform_3, window_bounds = array<i64: 256, 512>}, {pipeline_mode = #tpu.pipeline_mode<synchronous>, transform_indices = @transform_4, window_bounds = array<i64: 1, 512>}, {pipeline_mode = #tpu.pipeline_mode<synchronous>, transform_indices = @transform_5, window_bounds = array<i64: 512, 1024>}, {pipeline_mode = #tpu.pipeline_mode<synchronous>, transform_indices = @transform_6, window_bounds = array<i64: 1, 1024>}, {pipeline_mode = #tpu.pipeline_mode<synchronous>, transform_indices = @transform_7, window_bounds = array<i64: 1024, 128>}, {pipeline_mode = #tpu.pipeline_mode<synchronous>, transform_indices = @transform_8, window_bounds = array<i64: 1, 128>}, {transform_indices = @transform_9, window_bounds = array<i64: 16, 128>}]} {
    %c0 = arith.constant 0 : index
    %c0_0 = arith.constant 0 : index
    %0 = vector.load %arg1[%c0, %c0_0] : memref<16x64xf32, #tpu.memory_space<vmem>>, vector<16x64xf32>
    %c0_1 = arith.constant 0 : index
    %c0_2 = arith.constant 0 : index
    %1 = vector.load %arg2[%c0_1, %c0_2] : memref<64x256xf32, #tpu.memory_space<vmem>>, vector<64x256xf32>
    %cst = arith.constant dense<0.000000e+00> : vector<16x256xf32>
    %2 = tpu.matmul %0, %1, %cst {dimension_numbers = #tpu.dot_dimension_numbers<[1], [0], [0], [1], [0, 0, 1, 1], [], []>} : vector<16x64xf32>, vector<64x256xf32>, vector<16x256xf32> -> vector<16x256xf32>
    %c0_3 = arith.constant 0 : index
    %c0_4 = arith.constant 0 : index
    %3 = vector.load %arg3[%c0_3, %c0_4] : memref<1x256xf32, #tpu.memory_space<vmem>>, vector<1x256xf32>
    %4 = vector.broadcast %3 : vector<1x256xf32> to vector<16x256xf32>
    %5 = arith.addf %2, %4 : vector<16x256xf32>
    %cst_5 = arith.constant 0.000000e+00 : f32
    %6 = vector.broadcast %cst_5 : f32 to vector<16x256xf32>
    %7 = arith.cmpf ogt, %5, %6 : vector<16x256xf32>
    %cst_6 = arith.constant 2.000000e-01 : f32
    %8 = vector.broadcast %cst_6 : f32 to vector<16x256xf32>
    %9 = arith.mulf %8, %5 : vector<16x256xf32>
    %10 = arith.select %7, %5, %9 : vector<16x256xi1>, vector<16x256xf32>
    %c0_7 = arith.constant 0 : index
    %c0_8 = arith.constant 0 : index
    %11 = vector.load %arg4[%c0_7, %c0_8] : memref<256x512xf32, #tpu.memory_space<vmem>>, vector<256x512xf32>
    %cst_9 = arith.constant dense<0.000000e+00> : vector<16x512xf32>
    %12 = tpu.matmul %10, %11, %cst_9 {dimension_numbers = #tpu.dot_dimension_numbers<[1], [0], [0], [1], [0, 0, 1, 1], [], []>} : vector<16x256xf32>, vector<256x512xf32>, vector<16x512xf32> -> vector<16x512xf32>
    %c0_10 = arith.constant 0 : index
    %c0_11 = arith.constant 0 : index
    %13 = vector.load %arg5[%c0_10, %c0_11] : memref<1x512xf32, #tpu.memory_space<vmem>>, vector<1x512xf32>
    %14 = vector.broadcast %13 : vector<1x512xf32> to vector<16x512xf32>
    %15 = arith.addf %12, %14 : vector<16x512xf32>
    %cst_12 = arith.constant 0.000000e+00 : f32
    %16 = vector.broadcast %cst_12 : f32 to vector<16x512xf32>
    %17 = arith.cmpf ogt, %15, %16 : vector<16x512xf32>
    %cst_13 = arith.constant 2.000000e-01 : f32
    %18 = vector.broadcast %cst_13 : f32 to vector<16x512xf32>
    %19 = arith.mulf %18, %15 : vector<16x512xf32>
    %20 = arith.select %17, %15, %19 : vector<16x512xi1>, vector<16x512xf32>
    %c0_14 = arith.constant 0 : index
    %c0_15 = arith.constant 0 : index
    %21 = vector.load %arg6[%c0_14, %c0_15] : memref<512x1024xf32, #tpu.memory_space<vmem>>, vector<512x1024xf32>
    %cst_16 = arith.constant dense<0.000000e+00> : vector<16x1024xf32>
    %22 = tpu.matmul %20, %21, %cst_16 {dimension_numbers = #tpu.dot_dimension_numbers<[1], [0], [0], [1], [0, 0, 1, 1], [], []>} : vector<16x512xf32>, vector<512x1024xf32>, vector<16x1024xf32> -> vector<16x1024xf32>
    %c0_17 = arith.constant 0 : index
    %c0_18 = arith.constant 0 : index
    %23 = vector.load %arg7[%c0_17, %c0_18] : memref<1x1024xf32, #tpu.memory_space<vmem>>, vector<1x1024xf32>
    %24 = vector.broadcast %23 : vector<1x1024xf32> to vector<16x1024xf32>
    %25 = arith.addf %22, %24 : vector<16x1024xf32>
    %cst_19 = arith.constant 0.000000e+00 : f32
    %26 = vector.broadcast %cst_19 : f32 to vector<16x1024xf32>
    %27 = arith.cmpf ogt, %25, %26 : vector<16x1024xf32>
    %cst_20 = arith.constant 2.000000e-01 : f32
    %28 = vector.broadcast %cst_20 : f32 to vector<16x1024xf32>
    %29 = arith.mulf %28, %25 : vector<16x1024xf32>
    %30 = arith.select %27, %25, %29 : vector<16x1024xi1>, vector<16x1024xf32>
    %c0_21 = arith.constant 0 : index
    %c0_22 = arith.constant 0 : index
    %31 = vector.load %arg8[%c0_21, %c0_22] : memref<1024x128xf32, #tpu.memory_space<vmem>>, vector<1024x128xf32>
    %cst_23 = arith.constant dense<0.000000e+00> : vector<16x128xf32>
    %32 = tpu.matmul %30, %31, %cst_23 {dimension_numbers = #tpu.dot_dimension_numbers<[1], [0], [0], [1], [0, 0, 1, 1], [], []>} : vector<16x1024xf32>, vector<1024x128xf32>, vector<16x128xf32> -> vector<16x128xf32>
    %c0_24 = arith.constant 0 : index
    %c0_25 = arith.constant 0 : index
    %33 = vector.load %arg9[%c0_24, %c0_25] : memref<1x128xf32, #tpu.memory_space<vmem>>, vector<1x128xf32>
    %34 = vector.broadcast %33 : vector<1x128xf32> to vector<16x128xf32>
    %35 = arith.addf %32, %34 : vector<16x128xf32>
    %36 = math.tanh %35 : vector<16x128xf32>
    %c0_26 = arith.constant 0 : index
    %c0_27 = arith.constant 0 : index
    %37 = vector.load %arg10[%c0_26, %c0_27] : memref<16x128xf32, #tpu.memory_space<vmem>>, vector<16x128xf32>
    tpu.vector_store %arg10[%c0_26, %c0_27], %36 {strides = array<i32>} : memref<16x128xf32, #tpu.memory_space<vmem>>, vector<16x128xf32>,
    return
  }
  func.func @transform_0(%arg0: i32) -> (i32, i32) {
    %c0_i32 = arith.constant 0 : i32
    %c0_i32_0 = arith.constant 0 : i32
    return %arg0, %c0_i32 : i32, i32
  }
  func.func @transform_1(%arg0: i32) -> (i32, i32) {
    %c0_i32 = arith.constant 0 : i32
    %c0_i32_0 = arith.constant 0 : i32
    %c0_i32_1 = arith.constant 0 : i32
    return %c0_i32, %c0_i32_0 : i32, i32
  }
  func.func @transform_2(%arg0: i32) -> (i32, i32) {
    %c0_i32 = arith.constant 0 : i32
    %c0_i32_0 = arith.constant 0 : i32
    %c0_i32_1 = arith.constant 0 : i32
    return %c0_i32, %c0_i32_0 : i32, i32
  }
  func.func @transform_3(%arg0: i32) -> (i32, i32) {
    %c0_i32 = arith.constant 0 : i32
    %c0_i32_0 = arith.constant 0 : i32
    %c0_i32_1 = arith.constant 0 : i32
    return %c0_i32, %c0_i32_0 : i32, i32
  }
  func.func @transform_4(%arg0: i32) -> (i32, i32) {
    %c0_i32 = arith.constant 0 : i32
    %c0_i32_0 = arith.constant 0 : i32
    %c0_i32_1 = arith.constant 0 : i32
    return %c0_i32, %c0_i32_0 : i32, i32
  }
  func.func @transform_5(%arg0: i32) -> (i32, i32) {
    %c0_i32 = arith.constant 0 : i32
    %c0_i32_0 = arith.constant 0 : i32
    %c0_i32_1 = arith.constant 0 : i32
    return %c0_i32, %c0_i32_0 : i32, i32
  }
  func.func @transform_6(%arg0: i32) -> (i32, i32) {
    %c0_i32 = arith.constant 0 : i32
    %c0_i32_0 = arith.constant 0 : i32
    %c0_i32_1 = arith.constant 0 : i32
    return %c0_i32, %c0_i32_0 : i32, i32
  }
  func.func @transform_7(%arg0: i32) -> (i32, i32) {
    %c0_i32 = arith.constant 0 : i32
    %c0_i32_0 = arith.constant 0 : i32
    %c0_i32_1 = arith.constant 0 : i32
    return %c0_i32, %c0_i32_0 : i32, i32
  }
  func.func @transform_8(%arg0: i32) -> (i32, i32) {
    %c0_i32 = arith.constant 0 : i32
    %c0_i32_0 = arith.constant 0 : i32
    %c0_i32_1 = arith.constant 0 : i32
    return %c0_i32, %c0_i32_0 : i32, i32
  }
  func.func @transform_9(%arg0: i32) -> (i32, i32) {
    %c0_i32 = arith.constant 0 : i32
    %c0_i32_0 = arith.constant 0 : i32
    return %arg0, %c0_i32 : i32, i32
  }
}

</mosaic_0001>

<llo_original>
// kernel: tpu_custom_call.1
$region0: #{tpu_custom_call.1}
  #allocation0 [shape = 'u32[]', space=smem, size = 0x4, offset = 0x4, fixed_abs, tag = 'smem constant byte address 0x4 - core index']
  #allocation1 [shape = 'u32[144,128]{1,0:T(1,128)}', space=vmem, size = 0x12000, scoped, tag = 'internal scratch']
  %s0 = inlined_call_operand.hbm [shape: f32[16,64], index: 0, kind: input, shape index: {}]
  %s1 = inlined_call_operand.hbm [shape: f32[64,256], index: 1, kind: input, shape index: {}]
  %s2 = inlined_call_operand.hbm [shape: f32[1,256], index: 2, kind: input, shape index: {}]
  %s3 = inlined_call_operand.hbm [shape: f32[256,512], index: 3, kind: input, shape index: {}]
  %s4 = inlined_call_operand.hbm [shape: f32[1,512], index: 4, kind: input, shape index: {}]
  %s5 = inlined_call_operand.hbm [shape: f32[512,1024], index: 5, kind: input, shape index: {}]
  %s6 = inlined_call_operand.hbm [shape: f32[1,1024], index: 6, kind: input, shape index: {}]
  %s7 = inlined_call_operand.hbm [shape: f32[1024,128], index: 7, kind: input, shape index: {}]
  %s8 = inlined_call_operand.hbm [shape: f32[1,128], index: 8, kind: input, shape index: {}]
  %s9 = inlined_call_operand.hbm [shape: f32[16,128], index: 9, kind: output, shape index: {}]
  %s10 = sld [smem:[#allocation0]]
  $region82: #{tpu_custom_call.1} parent=0
    _
  %s12 = ssub.s32 1, %s10
  %s13 = scalar_select 0, %s12, %s10
  $region1: #{tpu_custom_call.1} parent=0
    #allocation2 [shape = 'u8[8192]{0}', space=vmem, size = 0x2000, scoped, tag = 'input window, operand 0, single buffered']
    #allocation3 [shape = 's32[1]{0}', space=sflag, size = 0x4, scoped, tag = 'scoped memory for tpu_custom_call.1']
    #allocation4 [shape = 's32[1]{0}', space=sflag, size = 0x4, scoped, tag = 'scoped memory for tpu_custom_call.1']
    #allocation5 [shape = 'u8[65536]{0}', space=vmem, size = 0x10000, scoped, tag = 'input window, operand 1, single buffered']
    #allocation6 [shape = 's32[1]{0}', space=sflag, size = 0x4, scoped, tag = 'scoped memory for tpu_custom_call.1']
    #allocation7 [shape = 'u8[1024]{0}', space=vmem, size = 0x400, scoped, tag = 'input window, operand 2, single buffered']
    #allocation8 [shape = 'u8[524288]{0}', space=vmem, size = 0x80000, scoped, tag = 'input window, operand 3, single buffered']
    #allocation9 [shape = 's32[1]{0}', space=sflag, size = 0x4, scoped, tag = 'scoped memory for tpu_custom_call.1']
    #allocation10 [shape = 'u8[2048]{0}', space=vmem, size = 0x800, scoped, tag = 'input window, operand 4, single buffered']
    #allocation11 [shape = 'u8[2097152]{0}', space=vmem, size = 0x200000, scoped, tag = 'input window, operand 5, single buffered']
    #allocation12 [shape = 's32[1]{0}', space=sflag, size = 0x4, scoped, tag = 'scoped memory for tpu_custom_call.1']
    #allocation13 [shape = 'u8[4096]{0}', space=vmem, size = 0x1000, scoped, tag = 'input window, operand 6, single buffered']
    #allocation14 [shape = 'u8[524288]{0}', space=vmem, size = 0x80000, scoped, tag = 'input window, operand 7, single buffered']
    #allocation15 [shape = 's32[1]{0}', space=sflag, size = 0x4, scoped, tag = 'scoped memory for tpu_custom_call.1']
    #allocation16 [shape = 'u8[512]{0}', space=vmem, size = 0x400, scoped, tag = 'input window, operand 8, single buffered']
    #allocation17 [shape = 'u8[8192]{0}', space=vmem, size = 0x2000, scoped, tag = 'output window, operand 0, single buffered']
    %14 = vsyncpa [#allocation3], 0
    %15 = vsyncpa [#allocation6], 0
    %16 = vsyncpa [#allocation9], 0
    %17 = vsyncpa [#allocation12], 0
    %18 = vsyncpa [#allocation15], 0
    %19 = vsyncpa [#allocation4], 0
    // Predicated region
    $region2: #{tpu_custom_call.1} parent=1 // pred_check
      _
    $region3: #{tpu_custom_call.1} parent=1 // pred_check_branch
      %21 = sbr.rel (0) target = $region5
    $region4: #{tpu_custom_call.1} parent=1 // pred_region
      %s23 = ssub.s32 256, 256
      %24 = vsyncadd [#allocation3], %s23
      %s25 = sshll.u32 [#allocation2], 4
      %s26 = int_to_ptr.vmem [resolvable:$true] %s25
      %31 = dma.hbm_to_vmem [thread:$0]  %s0, 256, %s26, [#allocation3], 128, 128, 8
    $region5: #{tpu_custom_call.1} parent=1 // pred_fallthru
      _
    // Predicated region
    $region6: #{tpu_custom_call.1} parent=1 // pred_check
      _
    $region7: #{tpu_custom_call.1} parent=1 // pred_check_branch
      %33 = sbr.rel (0) target = $region9
    $region8: #{tpu_custom_call.1} parent=1 // pred_region
      %s35 = ssub.s32 2048, 2048
      %36 = vsyncadd [#allocation6], %s35
      %s37 = sshll.u32 [#allocation5], 4
      %s38 = int_to_ptr.vmem [resolvable:$true] %s37
      %43 = dma.hbm_to_vmem [thread:$0]  %s1, 2048, %s38, [#allocation6], 256, 256, 16
    $region9: #{tpu_custom_call.1} parent=1 // pred_fallthru
      _
    // Predicated region
    $region10: #{tpu_custom_call.1} parent=1 // pred_check
      _
    $region11: #{tpu_custom_call.1} parent=1 // pred_check_branch
      %45 = sbr.rel (0) target = $region13
    $region12: #{tpu_custom_call.1} parent=1 // pred_region
      %s47 = ssub.s32 32, 32
      %48 = vsyncadd [#allocation6], %s47
      %s50 = sshll.u32 [#allocation7], 4
      %s51 = int_to_ptr.vmem [resolvable:$true] %s50
      %53 = dma.hbm_to_vmem [thread:$0]  %s2, 32, %s51, [#allocation6]
    $region13: #{tpu_custom_call.1} parent=1 // pred_fallthru
      _
    // Predicated region
    $region14: #{tpu_custom_call.1} parent=1 // pred_check
      _
    $region15: #{tpu_custom_call.1} parent=1 // pred_check_branch
      %55 = sbr.rel (0) target = $region17
    $region16: #{tpu_custom_call.1} parent=1 // pred_region
      %s57 = ssub.s32 16384, 16384
      %58 = vsyncadd [#allocation9], %s57
      %s59 = sshll.u32 [#allocation8], 4
      %s60 = int_to_ptr.vmem [resolvable:$true] %s59
      %65 = dma.hbm_to_vmem [thread:$0]  %s3, 16384, %s60, [#allocation9], 512, 512, 32
    $region17: #{tpu_custom_call.1} parent=1 // pred_fallthru
      _
    // Predicated region
    $region18: #{tpu_custom_call.1} parent=1 // pred_check
      _
    $region19: #{tpu_custom_call.1} parent=1 // pred_check_branch
      %67 = sbr.rel (0) target = $region21
    $region20: #{tpu_custom_call.1} parent=1 // pred_region
      %s69 = ssub.s32 64, 64
      %70 = vsyncadd [#allocation9], %s69
      %s72 = sshll.u32 [#allocation10], 4
      %s73 = int_to_ptr.vmem [resolvable:$true] %s72
      %75 = dma.hbm_to_vmem [thread:$0]  %s4, 64, %s73, [#allocation9]
    $region21: #{tpu_custom_call.1} parent=1 // pred_fallthru
      _
    // Predicated region
    $region22: #{tpu_custom_call.1} parent=1 // pred_check
      _
    $region23: #{tpu_custom_call.1} parent=1 // pred_check_branch
      %77 = sbr.rel (0) target = $region25
    $region24: #{tpu_custom_call.1} parent=1 // pred_region
      %s79 = ssub.s32 65536, 65536
      %80 = vsyncadd [#allocation12], %s79
      %s81 = sshll.u32 [#allocation11], 4
      %s82 = int_to_ptr.vmem [resolvable:$true] %s81
      %87 = dma.hbm_to_vmem [thread:$0]  %s5, 65536, %s82, [#allocation12], 1024, 1024, 64
    $region25: #{tpu_custom_call.1} parent=1 // pred_fallthru
      _
    // Predicated region
    $region26: #{tpu_custom_call.1} parent=1 // pred_check
      _
    $region27: #{tpu_custom_call.1} parent=1 // pred_check_branch
      %89 = sbr.rel (0) target = $region29
    $region28: #{tpu_custom_call.1} parent=1 // pred_region
      %s91 = ssub.s32 128, 128
      %92 = vsyncadd [#allocation12], %s91
      %s94 = sshll.u32 [#allocation13], 4
      %s95 = int_to_ptr.vmem [resolvable:$true] %s94
      %97 = dma.hbm_to_vmem [thread:$0]  %s6, 128, %s95, [#allocation12]
    $region29: #{tpu_custom_call.1} parent=1 // pred_fallthru
      _
    // Predicated region
    $region30: #{tpu_custom_call.1} parent=1 // pred_check
      _
    $region31: #{tpu_custom_call.1} parent=1 // pred_check_branch
      %99 = sbr.rel (0) target = $region33
    $region32: #{tpu_custom_call.1} parent=1 // pred_region
      %s101 = ssub.s32 16384, 16384
      %102 = vsyncadd [#allocation15], %s101
      %s103 = sshll.u32 [#allocation14], 4
      %s104 = int_to_ptr.vmem [resolvable:$true] %s103
      %109 = dma.hbm_to_vmem [thread:$0]  %s7, 16384, %s104, [#allocation15], 128, 128, 8
    $region33: #{tpu_custom_call.1} parent=1 // pred_fallthru
      _
    // Predicated region
    $region34: #{tpu_custom_call.1} parent=1 // pred_check
      _
    $region35: #{tpu_custom_call.1} parent=1 // pred_check_branch
      %111 = sbr.rel (0) target = $region37
    $region36: #{tpu_custom_call.1} parent=1 // pred_region
      %s113 = ssub.s32 16, 16
      %114 = vsyncadd [#allocation15], %s113
      %s116 = sshll.u32 [#allocation16], 4
      %s117 = int_to_ptr.vmem [resolvable:$true] %s116
      %119 = dma.hbm_to_vmem [thread:$0]  %s8, 16, %s117, [#allocation15]
    $region37: #{tpu_custom_call.1} parent=1 // pred_fallthru
      _
    // Predicated region
    $region38: #{tpu_custom_call.1} parent=1 // pred_check
      _
    $region39: #{tpu_custom_call.1} parent=1 // pred_check_branch
      %121 = sbr.rel (0) target = $region41
    $region40: #{tpu_custom_call.1} parent=1 // pred_region
      %122 = dma.done [#allocation3], 256
    $region41: #{tpu_custom_call.1} parent=1 // pred_fallthru
      _
    // Predicated region
    $region42: #{tpu_custom_call.1} parent=1 // pred_check
      _
    $region43: #{tpu_custom_call.1} parent=1 // pred_check_branch
      %124 = sbr.rel (0) target = $region45
    $region44: #{tpu_custom_call.1} parent=1 // pred_region
      %125 = dma.done [#allocation6], 2048
    $region45: #{tpu_custom_call.1} parent=1 // pred_fallthru
      _
    // Predicated region
    $region46: #{tpu_custom_call.1} parent=1 // pred_check
      _
    $region47: #{tpu_custom_call.1} parent=1 // pred_check_branch
      %127 = sbr.rel (0) target = $region49
    $region48: #{tpu_custom_call.1} parent=1 // pred_region
      %128 = dma.done [#allocation6], 32
    $region49: #{tpu_custom_call.1} parent=1 // pred_fallthru
      _
    // Predicated region
    $region50: #{tpu_custom_call.1} parent=1 // pred_check
      _
    $region51: #{tpu_custom_call.1} parent=1 // pred_check_branch
      %130 = sbr.rel (0) target = $region53
    $region52: #{tpu_custom_call.1} parent=1 // pred_region
      %131 = dma.done [#allocation9], 16384
    $region53: #{tpu_custom_call.1} parent=1 // pred_fallthru
      _
    // Predicated region
    $region54: #{tpu_custom_call.1} parent=1 // pred_check
      _
    $region55: #{tpu_custom_call.1} parent=1 // pred_check_branch
      %133 = sbr.rel (0) target = $region57
    $region56: #{tpu_custom_call.1} parent=1 // pred_region
      %134 = dma.done [#allocation9], 64
    $region57: #{tpu_custom_call.1} parent=1 // pred_fallthru
      _
    // Predicated region
    $region58: #{tpu_custom_call.1} parent=1 // pred_check
      _
    $region59: #{tpu_custom_call.1} parent=1 // pred_check_branch
      %136 = sbr.rel (0) target = $region61
    $region60: #{tpu_custom_call.1} parent=1 // pred_region
      %137 = dma.done [#allocation12], 65536
    $region61: #{tpu_custom_call.1} parent=1 // pred_fallthru
      _
    // Predicated region
    $region62: #{tpu_custom_call.1} parent=1 // pred_check
      _
    $region63: #{tpu_custom_call.1} parent=1 // pred_check_branch
      %139 = sbr.rel (0) target = $region65
    $region64: #{tpu_custom_call.1} parent=1 // pred_region
      %140 = dma.done [#allocation12], 128
    $region65: #{tpu_custom_call.1} parent=1 // pred_fallthru
      _
    // Predicated region
    $region66: #{tpu_custom_call.1} parent=1 // pred_check
      _
    $region67: #{tpu_custom_call.1} parent=1 // pred_check_branch
      %142 = sbr.rel (0) target = $region69
    $region68: #{tpu_custom_call.1} parent=1 // pred_region
      %143 = dma.done [#allocation15], 16384
    $region69: #{tpu_custom_call.1} parent=1 // pred_fallthru
      _
    // Predicated region
    $region70: #{tpu_custom_call.1} parent=1 // pred_check
      _
    $region71: #{tpu_custom_call.1} parent=1 // pred_check_branch
      %145 = sbr.rel (0) target = $region73
    $region72: #{tpu_custom_call.1} parent=1 // pred_region
      %146 = dma.done [#allocation15], 16
    $region73: #{tpu_custom_call.1} parent=1 // pred_fallthru
      _
    %v147 = vld [vmem:[#allocation2] sm:$0xff]
    %v148 = vld [vmem:[#allocation2 + $0x8] sm:$0xff]
    %v149 = vld [vmem:[#allocation5] sm:$0xff]
    %v150 = vld [vmem:[#allocation5 + $0x8] sm:$0xff]
    %v151 = vld [vmem:[#allocation5 + $0x10] sm:$0xff]
    %v152 = vld [vmem:[#allocation5 + $0x18] sm:$0xff]
    %v153 = vld [vmem:[#allocation5 + $0x20] sm:$0xff]
    %v154 = vld [vmem:[#allocation5 + $0x28] sm:$0xff]
    %v155 = vld [vmem:[#allocation5 + $0x30] sm:$0xff]
    %v156 = vld [vmem:[#allocation5 + $0x38] sm:$0xff]
    %v157 = vld [vmem:[#allocation5 + $0x40] sm:$0xff]
    %v158 = vld [vmem:[#allocation5 + $0x48] sm:$0xff]
    %v159 = vld [vmem:[#allocation5 + $0x50] sm:$0xff]
    %v160 = vld [vmem:[#allocation5 + $0x58] sm:$0xff]
    %v161 = vld [vmem:[#allocation5 + $0x60] sm:$0xff]
    %v162 = vld [vmem:[#allocation5 + $0x68] sm:$0xff]
    %v163 = vld [vmem:[#allocation5 + $0x70] sm:$0xff]
    %v164 = vld [vmem:[#allocation5 + $0x78] sm:$0xff]
    %v165 = vld [vmem:[#allocation7] sm:$0x3]
    %v167 = vlaneseq
    %v168 = vshrl.u32 %v167, 7
    %v169 = vsub.s32 0, %v168
    %v170 = vrot.slane %v165, %v169
    %v171 = vlaneseq
    %v172 = vshrl.u32 %v171, 7
    %v173 = vsub.s32 1, %v172
    %v174 = vrot.slane %v165, %v173
    %vm177 = vcmask 523264
    %v179 = vsel %vm177, %v147, 0
    %v182 = vsel %vm177, %v148, 0
    %184 = vmatprep.subr.mxu0 %v150
    %185 = vmatpush1.msra.mxu0 %v149
    %186 = vmatprep.subr.mxu0 %v152
    %187 = vmatpush1.msra.mxu0 %v151
    %188 = vmatprep.subr.mxu0 %v154
    %189 = vmatpush1.msra.mxu0 %v153
    %190 = vmatprep.subr.mxu0 %v156
    %191 = vmatpush1.msra.mxu0 %v155
    %192 = vmatprep.subr.mxu0 %v158
    %193 = vmatpush1.msra.mxu0 %v157
    %194 = vmatprep.subr.mxu0 %v160
    %195 = vmatpush1.msra.mxu0 %v159
    %196 = vmatprep.subr.mxu0 %v162
    %197 = vmatpush1.msra.mxu0 %v161
    %198 = vmatprep.subr.mxu0 %v164
    %199 = vmatpush1.msra.mxu0 %v163
    %200 = vmatprep.subr.mxu0 0.0
    %201 = vmatpush1.msra.mxu0 0.0
    %202 = vmatprep.subr.mxu0 0.0
    %203 = vmatpush1.msra.mxu0 0.0
    %204 = vmatprep.subr.mxu0 0.0
    %205 = vmatpush1.msra.mxu0 0.0
    %206 = vmatprep.subr.mxu0 0.0
    %207 = vmatpush1.msra.mxu0 0.0
    %208 = vmatprep.subr.mxu0 0.0
    %209 = vmatpush1.msra.mxu0 0.0
    %210 = vmatprep.subr.mxu0 0.0
    %211 = vmatpush1.msra.mxu0 0.0
    %212 = vmatprep.subr.mxu0 0.0
    %213 = vmatpush1.msra.mxu0 0.0
    %214 = vmatprep.subr.mxu0 0.0
    %215 = vmatpush1.msra.mxu0 0.0
    %216 = vmatprep.subr.mxu0 0.0
    %217 = vmatpush1.msra.mxu0 0.0
    %218 = vmatprep.subr.mxu0 0.0
    %219 = vmatpush1.msra.mxu0 0.0
    %220 = vmatprep.subr.mxu0 0.0
    %221 = vmatpush1.msra.mxu0 0.0
    %222 = vmatprep.subr.mxu0 0.0
    %223 = vmatpush1.msra.mxu0 0.0
    %224 = vmatprep.subr.mxu0 0.0
    %225 = vmatpush1.msra.mxu0 0.0
    %226 = vmatprep.subr.mxu0 0.0
    %227 = vmatpush1.msra.mxu0 0.0
    %228 = vmatprep.subr.mxu0 0.0
    %229 = vmatpush1.msra.mxu0 0.0
    %230 = vmatprep.subr.mxu0 0.0
    %231 = vmatpush1.msra.mxu0 0.0
    %232 = vmatprep.subr.mxu0 0.0
    %233 = vmatpush1.msra.mxu0 0.0
    %234 = vmatprep.subr.mxu0 0.0
    %235 = vmatpush1.msra.mxu0 0.0
    %236 = vmatprep.subr.mxu0 0.0
    %237 = vmatpush1.msra.mxu0 0.0
    %238 = vmatprep.subr.mxu0 0.0
    %239 = vmatpush1.msra.mxu0 0.0
    %240 = vmatprep.subr.mxu0 0.0
    %241 = vmatpush1.msra.mxu0 0.0
    %242 = vmatprep.subr.mxu0 0.0
    %243 = vmatpush1.msra.mxu0 0.0
    %244 = vmatprep.subr.mxu0 0.0
    %245 = vmatpush1.msra.mxu0 0.0
    %246 = vmatprep.subr.mxu0 0.0
    %247 = vmatpush1.msra.mxu0 0.0
    %248 = vmatprep.mubr.f32.mxu0 0.0
    %249 = vmatmul.mubr.f32.gmra.mrb[0].mxu0 %v179
    %v250 = vpop.f32.mrb[0].mxu0
    %v251 = vadd.f32 %v170, %v250
    %v252 = vpop.f32.mrb[0].mxu0
    %v253 = vadd.f32 %v174, %v252
    %254 = vmatprep.mubr.f32.mxu0 0.0
    %255 = vmatmul.mubr.f32.gmra.mrb[0].mxu0 %v182
    %v256 = vpop.f32.mrb[0].mxu0
    %v257 = vadd.f32 %v170, %v256
    %v258 = vpop.f32.mrb[0].mxu0
    %v259 = vadd.f32 %v174, %v258
    %260 = vdwg.mxu0
    %vm261 = vcmp.gt.f32.partialorder %v251, 0.0
    %vm262 = vcmp.gt.f32.partialorder %v253, 0.0
    %vm263 = vcmp.gt.f32.partialorder %v257, 0.0
    %vm264 = vcmp.gt.f32.partialorder %v259, 0.0
    %v265 = vmul.f32 %v251, 0.2
    %v266 = vmul.f32 %v253, 0.2
    %v267 = vmul.f32 %v257, 0.2
    %v268 = vmul.f32 %v259, 0.2
    %v269 = vsel %vm261, %v251, %v265
    %v270 = vsel %vm262, %v253, %v266
    %v271 = vsel %vm263, %v257, %v267
    %v272 = vsel %vm264, %v259, %v268
    %v273 = vld [vmem:[#allocation8] sm:$0xff]
    %v274 = vld [vmem:[#allocation8 + $0x8] sm:$0xff]
    %v275 = vld [vmem:[#allocation8 + $0x10] sm:$0xff]
    %v276 = vld [vmem:[#allocation8 + $0x18] sm:$0xff]
    %v277 = vld [vmem:[#allocation8 + $0x20] sm:$0xff]
    %v278 = vld [vmem:[#allocation8 + $0x28] sm:$0xff]
    %v279 = vld [vmem:[#allocation8 + $0x30] sm:$0xff]
    %v280 = vld [vmem:[#allocation8 + $0x38] sm:$0xff]
    %v281 = vld [vmem:[#allocation8 + $0x40] sm:$0xff]
    %v282 = vld [vmem:[#allocation8 + $0x48] sm:$0xff]
    %v283 = vld [vmem:[#allocation8 + $0x50] sm:$0xff]
    %v284 = vld [vmem:[#allocation8 + $0x58] sm:$0xff]
    %v285 = vld [vmem:[#allocation8 + $0x60] sm:$0xff]
    %v286 = vld [vmem:[#allocation8 + $0x68] sm:$0xff]
    %v287 = vld [vmem:[#allocation8 + $0x70] sm:$0xff]
    %v288 = vld [vmem:[#allocation8 + $0x78] sm:$0xff]
    %v289 = vld [vmem:[#allocation8 + $0x80] sm:$0xff]
    %v290 = vld [vmem:[#allocation8 + $0x88] sm:$0xff]
    %v291 = vld [vmem:[#allocation8 + $0x90] sm:$0xff]
    %v292 = vld [vmem:[#allocation8 + $0x98] sm:$0xff]
    %v293 = vld [vmem:[#allocation8 + $0xa0] sm:$0xff]
    %v294 = vld [vmem:[#allocation8 + $0xa8] sm:$0xff]
    %v295 = vld [vmem:[#allocation8 + $0xb0] sm:$0xff]
    %v296 = vld [vmem:[#allocation8 + $0xb8] sm:$0xff]
    %v297 = vld [vmem:[#allocation8 + $0xc0] sm:$0xff]
    %v298 = vld [vmem:[#allocation8 + $0xc8] sm:$0xff]
    %v299 = vld [vmem:[#allocation8 + $0xd0] sm:$0xff]
    %v300 = vld [vmem:[#allocation8 + $0xd8] sm:$0xff]
    %v301 = vld [vmem:[#allocation8 + $0xe0] sm:$0xff]
    %v302 = vld [vmem:[#allocation8 + $0xe8] sm:$0xff]
    %v303 = vld [vmem:[#allocation8 + $0xf0] sm:$0xff]
    %v304 = vld [vmem:[#allocation8 + $0xf8] sm:$0xff]
    %v305 = vld [vmem:[#allocation8 + $0x100] sm:$0xff]
    %v306 = vld [vmem:[#allocation8 + $0x108] sm:$0xff]
    %v307 = vld [vmem:[#allocation8 + $0x110] sm:$0xff]
    %v308 = vld [vmem:[#allocation8 + $0x118] sm:$0xff]
    %v309 = vld [vmem:[#allocation8 + $0x120] sm:$0xff]
    %v310 = vld [vmem:[#allocation8 + $0x128] sm:$0xff]
    %v311 = vld [vmem:[#allocation8 + $0x130] sm:$0xff]
    %v312 = vld [vmem:[#allocation8 + $0x138] sm:$0xff]
    %v313 = vld [vmem:[#allocation8 + $0x140] sm:$0xff]
    %v314 = vld [vmem:[#allocation8 + $0x148] sm:$0xff]
    %v315 = vld [vmem:[#allocation8 + $0x150] sm:$0xff]
    %v316 = vld [vmem:[#allocation8 + $0x158] sm:$0xff]
    %v317 = vld [vmem:[#allocation8 + $0x160] sm:$0xff]
    %v318 = vld [vmem:[#allocation8 + $0x168] sm:$0xff]
    %v319 = vld [vmem:[#allocation8 + $0x170] sm:$0xff]
    %v320 = vld [vmem:[#allocation8 + $0x178] sm:$0xff]
    %v321 = vld [vmem:[#allocation8 + $0x180] sm:$0xff]
    %v322 = vld [vmem:[#allocation8 + $0x188] sm:$0xff]
    %v323 = vld [vmem:[#allocation8 + $0x190] sm:$0xff]
    %v324 = vld [vmem:[#allocation8 + $0x198] sm:$0xff]
    %v325 = vld [vmem:[#allocation8 + $0x1a0] sm:$0xff]
    %v326 = vld [vmem:[#allocation8 + $0x1a8] sm:$0xff]
    %v327 = vld [vmem:[#allocation8 + $0x1b0] sm:$0xff]
    %v328 = vld [vmem:[#allocation8 + $0x1b8] sm:$0xff]
    %v329 = vld [vmem:[#allocation8 + $0x1c0] sm:$0xff]
    %v330 = vld [vmem:[#allocation8 + $0x1c8] sm:$0xff]
    %v331 = vld [vmem:[#allocation8 + $0x1d0] sm:$0xff]
    %v332 = vld [vmem:[#allocation8 + $0x1d8] sm:$0xff]
    %v333 = vld [vmem:[#allocation8 + $0x1e0] sm:$0xff]
    %v334 = vld [vmem:[#allocation8 + $0x1e8] sm:$0xff]
    %v335 = vld [vmem:[#allocation8 + $0x1f0] sm:$0xff]
    %v336 = vld [vmem:[#allocation8 + $0x1f8] sm:$0xff]
    %v337 = vld [vmem:[#allocation8 + $0x200] sm:$0xff]
    %v338 = vld [vmem:[#allocation8 + $0x208] sm:$0xff]
    %v339 = vld [vmem:[#allocation8 + $0x210] sm:$0xff]
    %v340 = vld [vmem:[#allocation8 + $0x218] sm:$0xff]
    %v341 = vld [vmem:[#allocation8 + $0x220] sm:$0xff]
    %v342 = vld [vmem:[#allocation8 + $0x228] sm:$0xff]
    %v343 = vld [vmem:[#allocation8 + $0x230] sm:$0xff]
    %v344 = vld [vmem:[#allocation8 + $0x238] sm:$0xff]
    %v345 = vld [vmem:[#allocation8 + $0x240] sm:$0xff]
    %v346 = vld [vmem:[#allocation8 + $0x248] sm:$0xff]
    %v347 = vld [vmem:[#allocation8 + $0x250] sm:$0xff]
    %v348 = vld [vmem:[#allocation8 + $0x258] sm:$0xff]
    %v349 = vld [vmem:[#allocation8 + $0x260] sm:$0xff]
    %v350 = vld [vmem:[#allocation8 + $0x268] sm:$0xff]
    %v351 = vld [vmem:[#allocation8 + $0x270] sm:$0xff]
    %v352 = vld [vmem:[#allocation8 + $0x278] sm:$0xff]
    %v353 = vld [vmem:[#allocation8 + $0x280] sm:$0xff]
    %v354 = vld [vmem:[#allocation8 + $0x288] sm:$0xff]
    %v355 = vld [vmem:[#allocation8 + $0x290] sm:$0xff]
    %v356 = vld [vmem:[#allocation8 + $0x298] sm:$0xff]
    %v357 = vld [vmem:[#allocation8 + $0x2a0] sm:$0xff]
    %v358 = vld [vmem:[#allocation8 + $0x2a8] sm:$0xff]
    %v359 = vld [vmem:[#allocation8 + $0x2b0] sm:$0xff]
    %v360 = vld [vmem:[#allocation8 + $0x2b8] sm:$0xff]
    %v361 = vld [vmem:[#allocation8 + $0x2c0] sm:$0xff]
    %v362 = vld [vmem:[#allocation8 + $0x2c8] sm:$0xff]
    %v363 = vld [vmem:[#allocation8 + $0x2d0] sm:$0xff]
    %v364 = vld [vmem:[#allocation8 + $0x2d8] sm:$0xff]
    %v365 = vld [vmem:[#allocation8 + $0x2e0] sm:$0xff]
    %v366 = vld [vmem:[#allocation8 + $0x2e8] sm:$0xff]
    %v367 = vld [vmem:[#allocation8 + $0x2f0] sm:$0xff]
    %v368 = vld [vmem:[#allocation8 + $0x2f8] sm:$0xff]
    %v369 = vld [vmem:[#allocation8 + $0x300] sm:$0xff]
    %v370 = vld [vmem:[#allocation8 + $0x308] sm:$0xff]
    %v371 = vld [vmem:[#allocation8 + $0x310] sm:$0xff]
    %v372 = vld [vmem:[#allocation8 + $0x318] sm:$0xff]
    %v373 = vld [vmem:[#allocation8 + $0x320] sm:$0xff]
    %v374 = vld [vmem:[#allocation8 + $0x328] sm:$0xff]
    %v375 = vld [vmem:[#allocation8 + $0x330] sm:$0xff]
    %v376 = vld [vmem:[#allocation8 + $0x338] sm:$0xff]
    %v377 = vld [vmem:[#allocation8 + $0x340] sm:$0xff]
    %v378 = vld [vmem:[#allocation8 + $0x348] sm:$0xff]
    %v379 = vld [vmem:[#allocation8 + $0x350] sm:$0xff]
    %v380 = vld [vmem:[#allocation8 + $0x358] sm:$0xff]
    %v381 = vld [vmem:[#allocation8 + $0x360] sm:$0xff]
    %v382 = vld [vmem:[#allocation8 + $0x368] sm:$0xff]
    %v383 = vld [vmem:[#allocation8 + $0x370] sm:$0xff]
    %v384 = vld [vmem:[#allocation8 + $0x378] sm:$0xff]
    %v385 = vld [vmem:[#allocation8 + $0x380] sm:$0xff]
    %v386 = vld [vmem:[#allocation8 + $0x388] sm:$0xff]
    %v387 = vld [vmem:[#allocation8 + $0x390] sm:$0xff]
    %v388 = vld [vmem:[#allocation8 + $0x398] sm:$0xff]
    %v389 = vld [vmem:[#allocation8 + $0x3a0] sm:$0xff]
    %v390 = vld [vmem:[#allocation8 + $0x3a8] sm:$0xff]
    %v391 = vld [vmem:[#allocation8 + $0x3b0] sm:$0xff]
    %v392 = vld [vmem:[#allocation8 + $0x3b8] sm:$0xff]
    %v393 = vld [vmem:[#allocation8 + $0x3c0] sm:$0xff]
    %v394 = vld [vmem:[#allocation8 + $0x3c8] sm:$0xff]
    %v395 = vld [vmem:[#allocation8 + $0x3d0] sm:$0xff]
    %v396 = vld [vmem:[#allocation8 + $0x3d8] sm:$0xff]
    %v397 = vld [vmem:[#allocation8 + $0x3e0] sm:$0xff]
    %v398 = vld [vmem:[#allocation8 + $0x3e8] sm:$0xff]
    %v399 = vld [vmem:[#allocation8 + $0x3f0] sm:$0xff]
    %v400 = vld [vmem:[#allocation8 + $0x3f8] sm:$0xff]
    %v401 = vld [vmem:[#allocation10] sm:$0xf]
    %v403 = vlaneseq
    %v404 = vshrl.u32 %v403, 7
    %v405 = vsub.s32 0, %v404
    %v406 = vrot.slane %v401, %v405
    %v407 = vlaneseq
    %v408 = vshrl.u32 %v407, 7
    %v409 = vsub.s32 1, %v408
    %v410 = vrot.slane %v401, %v409
    %v411 = vlaneseq
    %v412 = vshrl.u32 %v411, 7
    %v413 = vsub.s32 2, %v412
    %v414 = vrot.slane %v401, %v413
    %v415 = vlaneseq
    %v416 = vshrl.u32 %v415, 7
    %v417 = vsub.s32 3, %v416
    %v418 = vrot.slane %v401, %v417
    %423 = vmatprep.subr.mxu0 %v274
    %424 = vmatpush1.msra.mxu0 %v273
    %425 = vmatprep.subr.mxu0 %v278
    %426 = vmatpush1.msra.mxu0 %v277
    %427 = vmatprep.subr.mxu0 %v282
    %428 = vmatpush1.msra.mxu0 %v281
    %429 = vmatprep.subr.mxu0 %v286
    %430 = vmatpush1.msra.mxu0 %v285
    %431 = vmatprep.subr.mxu0 %v290
    %432 = vmatpush1.msra.mxu0 %v289
    %433 = vmatprep.subr.mxu0 %v294
    %434 = vmatpush1.msra.mxu0 %v293
    %435 = vmatprep.subr.mxu0 %v298
    %436 = vmatpush1.msra.mxu0 %v297
    %437 = vmatprep.subr.mxu0 %v302
    %438 = vmatpush1.msra.mxu0 %v301
    %439 = vmatprep.subr.mxu0 %v306
    %440 = vmatpush1.msra.mxu0 %v305
    %441 = vmatprep.subr.mxu0 %v310
    %442 = vmatpush1.msra.mxu0 %v309
    %443 = vmatprep.subr.mxu0 %v314
    %444 = vmatpush1.msra.mxu0 %v313
    %445 = vmatprep.subr.mxu0 %v318
    %446 = vmatpush1.msra.mxu0 %v317
    %447 = vmatprep.subr.mxu0 %v322
    %448 = vmatpush1.msra.mxu0 %v321
    %449 = vmatprep.subr.mxu0 %v326
    %450 = vmatpush1.msra.mxu0 %v325
    %451 = vmatprep.subr.mxu0 %v330
    %452 = vmatpush1.msra.mxu0 %v329
    %453 = vmatprep.subr.mxu0 %v334
    %454 = vmatpush1.msra.mxu0 %v333
    %455 = vmatprep.subr.mxu0 %v338
    %456 = vmatpush1.msra.mxu0 %v337
    %457 = vmatprep.subr.mxu0 %v342
    %458 = vmatpush1.msra.mxu0 %v341
    %459 = vmatprep.subr.mxu0 %v346
    %460 = vmatpush1.msra.mxu0 %v345
    %461 = vmatprep.subr.mxu0 %v350
    %462 = vmatpush1.msra.mxu0 %v349
    %463 = vmatprep.subr.mxu0 %v354
    %464 = vmatpush1.msra.mxu0 %v353
    %465 = vmatprep.subr.mxu0 %v358
    %466 = vmatpush1.msra.mxu0 %v357
    %467 = vmatprep.subr.mxu0 %v362
    %468 = vmatpush1.msra.mxu0 %v361
    %469 = vmatprep.subr.mxu0 %v366
    %470 = vmatpush1.msra.mxu0 %v365
    %471 = vmatprep.subr.mxu0 %v370
    %472 = vmatpush1.msra.mxu0 %v369
    %473 = vmatprep.subr.mxu0 %v374
    %474 = vmatpush1.msra.mxu0 %v373
    %475 = vmatprep.subr.mxu0 %v378
    %476 = vmatpush1.msra.mxu0 %v377
    %477 = vmatprep.subr.mxu0 %v382
    %478 = vmatpush1.msra.mxu0 %v381
    %479 = vmatprep.subr.mxu0 %v386
    %480 = vmatpush1.msra.mxu0 %v385
    %481 = vmatprep.subr.mxu0 %v390
    %482 = vmatpush1.msra.mxu0 %v389
    %483 = vmatprep.subr.mxu0 %v394
    %484 = vmatpush1.msra.mxu0 %v393
    %485 = vmatprep.subr.mxu0 %v398
    %486 = vmatpush1.msra.mxu0 %v397
    %487 = vmatprep.mubr.f32.mxu0 %v270
    %488 = vmatmul.mubr.f32.gmra.mrb[0].mxu0 %v269
    %v489 = vpop.f32.mrb[0].mxu0
    %v490 = vadd.f32 %v406, %v489
    %v491 = vpop.f32.mrb[0].mxu0
    %v492 = vadd.f32 %v410, %v491
    %493 = vmatprep.mubr.f32.mxu0 %v272
    %494 = vmatmul.mubr.f32.gmra.mrb[0].mxu0 %v271
    %v495 = vpop.f32.mrb[0].mxu0
    %v496 = vadd.f32 %v406, %v495
    %v497 = vpop.f32.mrb[0].mxu0
    %v498 = vadd.f32 %v410, %v497
    %499 = vdwg.mxu0
    %500 = vmatprep.subr.mxu0 %v276
    %501 = vmatpush1.msra.mxu0 %v275
    %502 = vmatprep.subr.mxu0 %v280
    %503 = vmatpush1.msra.mxu0 %v279
    %504 = vmatprep.subr.mxu0 %v284
    %505 = vmatpush1.msra.mxu0 %v283
    %506 = vmatprep.subr.mxu0 %v288
    %507 = vmatpush1.msra.mxu0 %v287
    %508 = vmatprep.subr.mxu0 %v292
    %509 = vmatpush1.msra.mxu0 %v291
    %510 = vmatprep.subr.mxu0 %v296
    %511 = vmatpush1.msra.mxu0 %v295
    %512 = vmatprep.subr.mxu0 %v300
    %513 = vmatpush1.msra.mxu0 %v299
    %514 = vmatprep.subr.mxu0 %v304
    %515 = vmatpush1.msra.mxu0 %v303
    %516 = vmatprep.subr.mxu0 %v308
    %517 = vmatpush1.msra.mxu0 %v307
    %518 = vmatprep.subr.mxu0 %v312
    %519 = vmatpush1.msra.mxu0 %v311
    %520 = vmatprep.subr.mxu0 %v316
    %521 = vmatpush1.msra.mxu0 %v315
    %522 = vmatprep.subr.mxu0 %v320
    %523 = vmatpush1.msra.mxu0 %v319
    %524 = vmatprep.subr.mxu0 %v324
    %525 = vmatpush1.msra.mxu0 %v323
    %526 = vmatprep.subr.mxu0 %v328
    %527 = vmatpush1.msra.mxu0 %v327
    %528 = vmatprep.subr.mxu0 %v332
    %529 = vmatpush1.msra.mxu0 %v331
    %530 = vmatprep.subr.mxu0 %v336
    %531 = vmatpush1.msra.mxu0 %v335
    %532 = vmatprep.subr.mxu0 %v340
    %533 = vmatpush1.msra.mxu0 %v339
    %534 = vmatprep.subr.mxu0 %v344
    %535 = vmatpush1.msra.mxu0 %v343
    %536 = vmatprep.subr.mxu0 %v348
    %537 = vmatpush1.msra.mxu0 %v347
    %538 = vmatprep.subr.mxu0 %v352
    %539 = vmatpush1.msra.mxu0 %v351
    %540 = vmatprep.subr.mxu0 %v356
    %541 = vmatpush1.msra.mxu0 %v355
    %542 = vmatprep.subr.mxu0 %v360
    %543 = vmatpush1.msra.mxu0 %v359
    %544 = vmatprep.subr.mxu0 %v364
    %545 = vmatpush1.msra.mxu0 %v363
    %546 = vmatprep.subr.mxu0 %v368
    %547 = vmatpush1.msra.mxu0 %v367
    %548 = vmatprep.subr.mxu0 %v372
    %549 = vmatpush1.msra.mxu0 %v371
    %550 = vmatprep.subr.mxu0 %v376
    %551 = vmatpush1.msra.mxu0 %v375
    %552 = vmatprep.subr.mxu0 %v380
    %553 = vmatpush1.msra.mxu0 %v379
    %554 = vmatprep.subr.mxu0 %v384
    %555 = vmatpush1.msra.mxu0 %v383
    %556 = vmatprep.subr.mxu0 %v388
    %557 = vmatpush1.msra.mxu0 %v387
    %558 = vmatprep.subr.mxu0 %v392
    %559 = vmatpush1.msra.mxu0 %v391
    %560 = vmatprep.subr.mxu0 %v396
    %561 = vmatpush1.msra.mxu0 %v395
    %562 = vmatprep.subr.mxu0 %v400
    %563 = vmatpush1.msra.mxu0 %v399
    %564 = vmatprep.mubr.f32.mxu0 %v270
    %565 = vmatmul.mubr.f32.gmra.mrb[0].mxu0 %v269
    %v566 = vpop.f32.mrb[0].mxu0
    %v567 = vadd.f32 %v414, %v566
    %v568 = vpop.f32.mrb[0].mxu0
    %v569 = vadd.f32 %v418, %v568
    %570 = vmatprep.mubr.f32.mxu0 %v272
    %571 = vmatmul.mubr.f32.gmra.mrb[0].mxu0 %v271
    %v572 = vpop.f32.mrb[0].mxu0
    %v573 = vadd.f32 %v414, %v572
    %v574 = vpop.f32.mrb[0].mxu0
    %v575 = vadd.f32 %v418, %v574
    %576 = vdwg.mxu0
    %vm577 = vcmp.gt.f32.partialorder %v490, 0.0
    %vm578 = vcmp.gt.f32.partialorder %v492, 0.0
    %vm579 = vcmp.gt.f32.partialorder %v567, 0.0
    %vm580 = vcmp.gt.f32.partialorder %v569, 0.0
    %vm581 = vcmp.gt.f32.partialorder %v496, 0.0
    %vm582 = vcmp.gt.f32.partialorder %v498, 0.0
    %vm583 = vcmp.gt.f32.partialorder %v573, 0.0
    %vm584 = vcmp.gt.f32.partialorder %v575, 0.0
    %v585 = vmul.f32 %v490, 0.2
    %v586 = vmul.f32 %v492, 0.2
    %v587 = vmul.f32 %v567, 0.2
    %v588 = vmul.f32 %v569, 0.2
    %v589 = vmul.f32 %v496, 0.2
    %v590 = vmul.f32 %v498, 0.2
    %v591 = vmul.f32 %v573, 0.2
    %v592 = vmul.f32 %v575, 0.2
    %v593 = vsel %vm577, %v490, %v585
    %v594 = vsel %vm578, %v492, %v586
    %v595 = vsel %vm579, %v567, %v587
    %v596 = vsel %vm580, %v569, %v588
    %v597 = vsel %vm581, %v496, %v589
    %v598 = vsel %vm582, %v498, %v590
    %v599 = vsel %vm583, %v573, %v591
    %v600 = vsel %vm584, %v575, %v592
    %v601 = vld [vmem:[#allocation11] sm:$0xff]
    %v602 = vld [vmem:[#allocation11 + $0x8] sm:$0xff]
    %v603 = vld [vmem:[#allocation11 + $0x10] sm:$0xff]
    %v604 = vld [vmem:[#allocation11 + $0x18] sm:$0xff]
    %v605 = vld [vmem:[#allocation11 + $0x20] sm:$0xff]
    %v606 = vld [vmem:[#allocation11 + $0x28] sm:$0xff]
    %v607 = vld [vmem:[#allocation11 + $0x30] sm:$0xff]
    %v608 = vld [vmem:[#allocation11 + $0x38] sm:$0xff]
    %v609 = vld [vmem:[#allocation11 + $0x40] sm:$0xff]
    %v610 = vld [vmem:[#allocation11 + $0x48] sm:$0xff]
    %v611 = vld [vmem:[#allocation11 + $0x50] sm:$0xff]
    %v612 = vld [vmem:[#allocation11 + $0x58] sm:$0xff]
    %v613 = vld [vmem:[#allocation11 + $0x60] sm:$0xff]
    %v614 = vld [vmem:[#allocation11 + $0x68] sm:$0xff]
    %v615 = vld [vmem:[#allocation11 + $0x70] sm:$0xff]
    %v616 = vld [vmem:[#allocation11 + $0x78] sm:$0xff]
    %v617 = vld [vmem:[#allocation11 + $0x80] sm:$0xff]
    %v618 = vld [vmem:[#allocation11 + $0x88] sm:$0xff]
    %v619 = vld [vmem:[#allocation11 + $0x90] sm:$0xff]
    %v620 = vld [vmem:[#allocation11 + $0x98] sm:$0xff]
    %v621 = vld [vmem:[#allocation11 + $0xa0] sm:$0xff]
    %v622 = vld [vmem:[#allocation11 + $0xa8] sm:$0xff]
    %v623 = vld [vmem:[#allocation11 + $0xb0] sm:$0xff]
    %v624 = vld [vmem:[#allocation11 + $0xb8] sm:$0xff]
    %v625 = vld [vmem:[#allocation11 + $0xc0] sm:$0xff]
    %v626 = vld [vmem:[#allocation11 + $0xc8] sm:$0xff]
    %v627 = vld [vmem:[#allocation11 + $0xd0] sm:$0xff]
    %v628 = vld [vmem:[#allocation11 + $0xd8] sm:$0xff]
    %v629 = vld [vmem:[#allocation11 + $0xe0] sm:$0xff]
    %v630 = vld [vmem:[#allocation11 + $0xe8] sm:$0xff]
    %v631 = vld [vmem:[#allocation11 + $0xf0] sm:$0xff]
    %v632 = vld [vmem:[#allocation11 + $0xf8] sm:$0xff]
    %v633 = vld [vmem:[#allocation11 + $0x100] sm:$0xff]
    %v634 = vld [vmem:[#allocation11 + $0x108] sm:$0xff]
    %v635 = vld [vmem:[#allocation11 + $0x110] sm:$0xff]
    %v636 = vld [vmem:[#allocation11 + $0x118] sm:$0xff]
    %v637 = vld [vmem:[#allocation11 + $0x120] sm:$0xff]
    %v638 = vld [vmem:[#allocation11 + $0x128] sm:$0xff]
    %v639 = vld [vmem:[#allocation11 + $0x130] sm:$0xff]
    %v640 = vld [vmem:[#allocation11 + $0x138] sm:$0xff]
    %v641 = vld [vmem:[#allocation11 + $0x140] sm:$0xff]
    %v642 = vld [vmem:[#allocation11 + $0x148] sm:$0xff]
    %v643 = vld [vmem:[#allocation11 + $0x150] sm:$0xff]
    %v644 = vld [vmem:[#allocation11 + $0x158] sm:$0xff]
    %v645 = vld [vmem:[#allocation11 + $0x160] sm:$0xff]
    %v646 = vld [vmem:[#allocation11 + $0x168] sm:$0xff]
    %v647 = vld [vmem:[#allocation11 + $0x170] sm:$0xff]
    %v648 = vld [vmem:[#allocation11 + $0x178] sm:$0xff]
    %v649 = vld [vmem:[#allocation11 + $0x180] sm:$0xff]
    %v650 = vld [vmem:[#allocation11 + $0x188] sm:$0xff]
    %v651 = vld [vmem:[#allocation11 + $0x190] sm:$0xff]
    %v652 = vld [vmem:[#allocation11 + $0x198] sm:$0xff]
    %v653 = vld [vmem:[#allocation11 + $0x1a0] sm:$0xff]
    %v654 = vld [vmem:[#allocation11 + $0x1a8] sm:$0xff]
    %v655 = vld [vmem:[#allocation11 + $0x1b0] sm:$0xff]
    %v656 = vld [vmem:[#allocation11 + $0x1b8] sm:$0xff]
    %v657 = vld [vmem:[#allocation11 + $0x1c0] sm:$0xff]
    %v658 = vld [vmem:[#allocation11 + $0x1c8] sm:$0xff]
    %v659 = vld [vmem:[#allocation11 + $0x1d0] sm:$0xff]
    %v660 = vld [vmem:[#allocation11 + $0x1d8] sm:$0xff]
    %v661 = vld [vmem:[#allocation11 + $0x1e0] sm:$0xff]
    %v662 = vld [vmem:[#allocation11 + $0x1e8] sm:$0xff]
    %v663 = vld [vmem:[#allocation11 + $0x1f0] sm:$0xff]
    %v664 = vld [vmem:[#allocation11 + $0x1f8] sm:$0xff]
    %v665 = vld [vmem:[#allocation11 + $0x200] sm:$0xff]
    %v666 = vld [vmem:[#allocation11 + $0x208] sm:$0xff]
    %v667 = vld [vmem:[#allocation11 + $0x210] sm:$0xff]
    %v668 = vld [vmem:[#allocation11 + $0x218] sm:$0xff]
    %v669 = vld [vmem:[#allocation11 + $0x220] sm:$0xff]
    %v670 = vld [vmem:[#allocation11 + $0x228] sm:$0xff]
    %v671 = vld [vmem:[#allocation11 + $0x230] sm:$0xff]
    %v672 = vld [vmem:[#allocation11 + $0x238] sm:$0xff]
    %v673 = vld [vmem:[#allocation11 + $0x240] sm:$0xff]
    %v674 = vld [vmem:[#allocation11 + $0x248] sm:$0xff]
    %v675 = vld [vmem:[#allocation11 + $0x250] sm:$0xff]
    %v676 = vld [vmem:[#allocation11 + $0x258] sm:$0xff]
    %v677 = vld [vmem:[#allocation11 + $0x260] sm:$0xff]
    %v678 = vld [vmem:[#allocation11 + $0x268] sm:$0xff]
    %v679 = vld [vmem:[#allocation11 + $0x270] sm:$0xff]
    %v680 = vld [vmem:[#allocation11 + $0x278] sm:$0xff]
    %v681 = vld [vmem:[#allocation11 + $0x280] sm:$0xff]
    %v682 = vld [vmem:[#allocation11 + $0x288] sm:$0xff]
    %v683 = vld [vmem:[#allocation11 + $0x290] sm:$0xff]
    %v684 = vld [vmem:[#allocation11 + $0x298] sm:$0xff]
    %v685 = vld [vmem:[#allocation11 + $0x2a0] sm:$0xff]
    %v686 = vld [vmem:[#allocation11 + $0x2a8] sm:$0xff]
    %v687 = vld [vmem:[#allocation11 + $0x2b0] sm:$0xff]
    %v688 = vld [vmem:[#allocation11 + $0x2b8] sm:$0xff]
    %v689 = vld [vmem:[#allocation11 + $0x2c0] sm:$0xff]
    %v690 = vld [vmem:[#allocation11 + $0x2c8] sm:$0xff]
    %v691 = vld [vmem:[#allocation11 + $0x2d0] sm:$0xff]
    %v692 = vld [vmem:[#allocation11 + $0x2d8] sm:$0xff]
    %v693 = vld [vmem:[#allocation11 + $0x2e0] sm:$0xff]
    %v694 = vld [vmem:[#allocation11 + $0x2e8] sm:$0xff]
    %v695 = vld [vmem:[#allocation11 + $0x2f0] sm:$0xff]
    %v696 = vld [vmem:[#allocation11 + $0x2f8] sm:$0xff]
    %v697 = vld [vmem:[#allocation11 + $0x300] sm:$0xff]
    %v698 = vld [vmem:[#allocation11 + $0x308] sm:$0xff]
    %v699 = vld [vmem:[#allocation11 + $0x310] sm:$0xff]
    %v700 = vld [vmem:[#allocation11 + $0x318] sm:$0xff]
    %v701 = vld [vmem:[#allocation11 + $0x320] sm:$0xff]
    %v702 = vld [vmem:[#allocation11 + $0x328] sm:$0xff]
    %v703 = vld [vmem:[#allocation11 + $0x330] sm:$0xff]
    %v704 = vld [vmem:[#allocation11 + $0x338] sm:$0xff]
    %v705 = vld [vmem:[#allocation11 + $0x340] sm:$0xff]
    %v706 = vld [vmem:[#allocation11 + $0x348] sm:$0xff]
    %v707 = vld [vmem:[#allocation11 + $0x350] sm:$0xff]
    %v708 = vld [vmem:[#allocation11 + $0x358] sm:$0xff]
    %v709 = vld [vmem:[#allocation11 + $0x360] sm:$0xff]
    %v710 = vld [vmem:[#allocation11 + $0x368] sm:$0xff]
    %v711 = vld [vmem:[#allocation11 + $0x370] sm:$0xff]
    %v712 = vld [vmem:[#allocation11 + $0x378] sm:$0xff]
    %v713 = vld [vmem:[#allocation11 + $0x380] sm:$0xff]
    %v714 = vld [vmem:[#allocation11 + $0x388] sm:$0xff]
    %v715 = vld [vmem:[#allocation11 + $0x390] sm:$0xff]
    %v716 = vld [vmem:[#allocation11 + $0x398] sm:$0xff]
    %v717 = vld [vmem:[#allocation11 + $0x3a0] sm:$0xff]
    %v718 = vld [vmem:[#allocation11 + $0x3a8] sm:$0xff]
    %v719 = vld [vmem:[#allocation11 + $0x3b0] sm:$0xff]
    %v720 = vld [vmem:[#allocation11 + $0x3b8] sm:$0xff]
    %v721 = vld [vmem:[#allocation11 + $0x3c0] sm:$0xff]
    %v722 = vld [vmem:[#allocation11 + $0x3c8] sm:$0xff]
    %v723 = vld [vmem:[#allocation11 + $0x3d0] sm:$0xff]
    %v724 = vld [vmem:[#allocation11 + $0x3d8] sm:$0xff]
    %v725 = vld [vmem:[#allocation11 + $0x3e0] sm:$0xff]
    %v726 = vld [vmem:[#allocation11 + $0x3e8] sm:$0xff]
    %v727 = vld [vmem:[#allocation11 + $0x3f0] sm:$0xff]
    %v728 = vld [vmem:[#allocation11 + $0x3f8] sm:$0xff]
    %v729 = vld [vmem:[#allocation11 + $0x400] sm:$0xff]
    %v730 = vld [vmem:[#allocation11 + $0x408] sm:$0xff]
    %v731 = vld [vmem:[#allocation11 + $0x410] sm:$0xff]
    %v732 = vld [vmem:[#allocation11 + $0x418] sm:$0xff]
    %v733 = vld [vmem:[#allocation11 + $0x420] sm:$0xff]
    %v734 = vld [vmem:[#allocation11 + $0x428] sm:$0xff]
    %v735 = vld [vmem:[#allocation11 + $0x430] sm:$0xff]
    %v736 = vld [vmem:[#allocation11 + $0x438] sm:$0xff]
    %v737 = vld [vmem:[#allocation11 + $0x440] sm:$0xff]
    %v738 = vld [vmem:[#allocation11 + $0x448] sm:$0xff]
    %v739 = vld [vmem:[#allocation11 + $0x450] sm:$0xff]
    %v740 = vld [vmem:[#allocation11 + $0x458] sm:$0xff]
    %v741 = vld [vmem:[#allocation11 + $0x460] sm:$0xff]
    %v742 = vld [vmem:[#allocation11 + $0x468] sm:$0xff]
    %v743 = vld [vmem:[#allocation11 + $0x470] sm:$0xff]
    %v744 = vld [vmem:[#allocation11 + $0x478] sm:$0xff]
    %v745 = vld [vmem:[#allocation11 + $0x480] sm:$0xff]
    %v746 = vld [vmem:[#allocation11 + $0x488] sm:$0xff]
    %v747 = vld [vmem:[#allocation11 + $0x490] sm:$0xff]
    %v748 = vld [vmem:[#allocation11 + $0x498] sm:$0xff]
    %v749 = vld [vmem:[#allocation11 + $0x4a0] sm:$0xff]
    %v750 = vld [vmem:[#allocation11 + $0x4a8] sm:$0xff]
    %v751 = vld [vmem:[#allocation11 + $0x4b0] sm:$0xff]
    %v752 = vld [vmem:[#allocation11 + $0x4b8] sm:$0xff]
    %v753 = vld [vmem:[#allocation11 + $0x4c0] sm:$0xff]
    %v754 = vld [vmem:[#allocation11 + $0x4c8] sm:$0xff]
    %v755 = vld [vmem:[#allocation11 + $0x4d0] sm:$0xff]
    %v756 = vld [vmem:[#allocation11 + $0x4d8] sm:$0xff]
    %v757 = vld [vmem:[#allocation11 + $0x4e0] sm:$0xff]
    %v758 = vld [vmem:[#allocation11 + $0x4e8] sm:$0xff]
    %v759 = vld [vmem:[#allocation11 + $0x4f0] sm:$0xff]
    %v760 = vld [vmem:[#allocation11 + $0x4f8] sm:$0xff]
    %v761 = vld [vmem:[#allocation11 + $0x500] sm:$0xff]
    %v762 = vld [vmem:[#allocation11 + $0x508] sm:$0xff]
    %v763 = vld [vmem:[#allocation11 + $0x510] sm:$0xff]
    %v764 = vld [vmem:[#allocation11 + $0x518] sm:$0xff]
    %v765 = vld [vmem:[#allocation11 + $0x520] sm:$0xff]
    %v766 = vld [vmem:[#allocation11 + $0x528] sm:$0xff]
    %v767 = vld [vmem:[#allocation11 + $0x530] sm:$0xff]
    %v768 = vld [vmem:[#allocation11 + $0x538] sm:$0xff]
    %v769 = vld [vmem:[#allocation11 + $0x540] sm:$0xff]
    %v770 = vld [vmem:[#allocation11 + $0x548] sm:$0xff]
    %v771 = vld [vmem:[#allocation11 + $0x550] sm:$0xff]
    %v772 = vld [vmem:[#allocation11 + $0x558] sm:$0xff]
    %v773 = vld [vmem:[#allocation11 + $0x560] sm:$0xff]
    %v774 = vld [vmem:[#allocation11 + $0x568] sm:$0xff]
    %v775 = vld [vmem:[#allocation11 + $0x570] sm:$0xff]
    %v776 = vld [vmem:[#allocation11 + $0x578] sm:$0xff]
    %v777 = vld [vmem:[#allocation11 + $0x580] sm:$0xff]
    %v778 = vld [vmem:[#allocation11 + $0x588] sm:$0xff]
    %v779 = vld [vmem:[#allocation11 + $0x590] sm:$0xff]
    %v780 = vld [vmem:[#allocation11 + $0x598] sm:$0xff]
    %v781 = vld [vmem:[#allocation11 + $0x5a0] sm:$0xff]
    %v782 = vld [vmem:[#allocation11 + $0x5a8] sm:$0xff]
    %v783 = vld [vmem:[#allocation11 + $0x5b0] sm:$0xff]
    %v784 = vld [vmem:[#allocation11 + $0x5b8] sm:$0xff]
    %v785 = vld [vmem:[#allocation11 + $0x5c0] sm:$0xff]
    %v786 = vld [vmem:[#allocation11 + $0x5c8] sm:$0xff]
    %v787 = vld [vmem:[#allocation11 + $0x5d0] sm:$0xff]
    %v788 = vld [vmem:[#allocation11 + $0x5d8] sm:$0xff]
    %v789 = vld [vmem:[#allocation11 + $0x5e0] sm:$0xff]
    %v790 = vld [vmem:[#allocation11 + $0x5e8] sm:$0xff]
    %v791 = vld [vmem:[#allocation11 + $0x5f0] sm:$0xff]
    %v792 = vld [vmem:[#allocation11 + $0x5f8] sm:$0xff]
    %v793 = vld [vmem:[#allocation11 + $0x600] sm:$0xff]
    %v794 = vld [vmem:[#allocation11 + $0x608] sm:$0xff]
    %v795 = vld [vmem:[#allocation11 + $0x610] sm:$0xff]
    %v796 = vld [vmem:[#allocation11 + $0x618] sm:$0xff]
    %v797 = vld [vmem:[#allocation11 + $0x620] sm:$0xff]
    %v798 = vld [vmem:[#allocation11 + $0x628] sm:$0xff]
    %v799 = vld [vmem:[#allocation11 + $0x630] sm:$0xff]
    %v800 = vld [vmem:[#allocation11 + $0x638] sm:$0xff]
    %v801 = vld [vmem:[#allocation11 + $0x640] sm:$0xff]
    %v802 = vld [vmem:[#allocation11 + $0x648] sm:$0xff]
    %v803 = vld [vmem:[#allocation11 + $0x650] sm:$0xff]
    %v804 = vld [vmem:[#allocation11 + $0x658] sm:$0xff]
    %v805 = vld [vmem:[#allocation11 + $0x660] sm:$0xff]
    %v806 = vld [vmem:[#allocation11 + $0x668] sm:$0xff]
    %v807 = vld [vmem:[#allocation11 + $0x670] sm:$0xff]
    %v808 = vld [vmem:[#allocation11 + $0x678] sm:$0xff]
    %v809 = vld [vmem:[#allocation11 + $0x680] sm:$0xff]
    %v810 = vld [vmem:[#allocation11 + $0x688] sm:$0xff]
    %v811 = vld [vmem:[#allocation11 + $0x690] sm:$0xff]
    %v812 = vld [vmem:[#allocation11 + $0x698] sm:$0xff]
    %v813 = vld [vmem:[#allocation11 + $0x6a0] sm:$0xff]
    %v814 = vld [vmem:[#allocation11 + $0x6a8] sm:$0xff]
    %v815 = vld [vmem:[#allocation11 + $0x6b0] sm:$0xff]
    %v816 = vld [vmem:[#allocation11 + $0x6b8] sm:$0xff]
    %v817 = vld [vmem:[#allocation11 + $0x6c0] sm:$0xff]
    %v818 = vld [vmem:[#allocation11 + $0x6c8] sm:$0xff]
    %v819 = vld [vmem:[#allocation11 + $0x6d0] sm:$0xff]
    %v820 = vld [vmem:[#allocation11 + $0x6d8] sm:$0xff]
    %v821 = vld [vmem:[#allocation11 + $0x6e0] sm:$0xff]
    %v822 = vld [vmem:[#allocation11 + $0x6e8] sm:$0xff]
    %v823 = vld [vmem:[#allocation11 + $0x6f0] sm:$0xff]
    %v824 = vld [vmem:[#allocation11 + $0x6f8] sm:$0xff]
    %v825 = vld [vmem:[#allocation11 + $0x700] sm:$0xff]
    %v826 = vld [vmem:[#allocation11 + $0x708] sm:$0xff]
    %v827 = vld [vmem:[#allocation11 + $0x710] sm:$0xff]
    %v828 = vld [vmem:[#allocation11 + $0x718] sm:$0xff]
    %v829 = vld [vmem:[#allocation11 + $0x720] sm:$0xff]
    %v830 = vld [vmem:[#allocation11 + $0x728] sm:$0xff]
    %v831 = vld [vmem:[#allocation11 + $0x730] sm:$0xff]
    %v832 = vld [vmem:[#allocation11 + $0x738] sm:$0xff]
    %v833 = vld [vmem:[#allocation11 + $0x740] sm:$0xff]
    %v834 = vld [vmem:[#allocation11 + $0x748] sm:$0xff]
    %v835 = vld [vmem:[#allocation11 + $0x750] sm:$0xff]
    %v836 = vld [vmem:[#allocation11 + $0x758] sm:$0xff]
    %v837 = vld [vmem:[#allocation11 + $0x760] sm:$0xff]
    %v838 = vld [vmem:[#allocation11 + $0x768] sm:$0xff]
    %v839 = vld [vmem:[#allocation11 + $0x770] sm:$0xff]
    %v840 = vld [vmem:[#allocation11 + $0x778] sm:$0xff]
    %v841 = vld [vmem:[#allocation11 + $0x780] sm:$0xff]
    %v842 = vld [vmem:[#allocation11 + $0x788] sm:$0xff]
    %v843 = vld [vmem:[#allocation11 + $0x790] sm:$0xff]
    %v844 = vld [vmem:[#allocation11 + $0x798] sm:$0xff]
    %v845 = vld [vmem:[#allocation11 + $0x7a0] sm:$0xff]
    %v846 = vld [vmem:[#allocation11 + $0x7a8] sm:$0xff]
    %v847 = vld [vmem:[#allocation11 + $0x7b0] sm:$0xff]
    %v848 = vld [vmem:[#allocation11 + $0x7b8] sm:$0xff]
    %v849 = vld [vmem:[#allocation11 + $0x7c0] sm:$0xff]
    %v850 = vld [vmem:[#allocation11 + $0x7c8] sm:$0xff]
    %v851 = vld [vmem:[#allocation11 + $0x7d0] sm:$0xff]
    %v852 = vld [vmem:[#allocation11 + $0x7d8] sm:$0xff]
    %v853 = vld [vmem:[#allocation11 + $0x7e0] sm:$0xff]
    %v854 = vld [vmem:[#allocation11 + $0x7e8] sm:$0xff]
    %v855 = vld [vmem:[#allocation11 + $0x7f0] sm:$0xff]
    %v856 = vld [vmem:[#allocation11 + $0x7f8] sm:$0xff]
    %v857 = vld [vmem:[#allocation11 + $0x800] sm:$0xff]
    %v858 = vld [vmem:[#allocation11 + $0x808] sm:$0xff]
    %v859 = vld [vmem:[#allocation11 + $0x810] sm:$0xff]
    %v860 = vld [vmem:[#allocation11 + $0x818] sm:$0xff]
    %v861 = vld [vmem:[#allocation11 + $0x820] sm:$0xff]
    %v862 = vld [vmem:[#allocation11 + $0x828] sm:$0xff]
    %v863 = vld [vmem:[#allocation11 + $0x830] sm:$0xff]
    %v864 = vld [vmem:[#allocation11 + $0x838] sm:$0xff]
    %v865 = vld [vmem:[#allocation11 + $0x840] sm:$0xff]
    %v866 = vld [vmem:[#allocation11 + $0x848] sm:$0xff]
    %v867 = vld [vmem:[#allocation11 + $0x850] sm:$0xff]
    %v868 = vld [vmem:[#allocation11 + $0x858] sm:$0xff]
    %v869 = vld [vmem:[#allocation11 + $0x860] sm:$0xff]
    %v870 = vld [vmem:[#allocation11 + $0x868] sm:$0xff]
    %v871 = vld [vmem:[#allocation11 + $0x870] sm:$0xff]
    %v872 = vld [vmem:[#allocation11 + $0x878] sm:$0xff]
    %v873 = vld [vmem:[#allocation11 + $0x880] sm:$0xff]
    %v874 = vld [vmem:[#allocation11 + $0x888] sm:$0xff]
    %v875 = vld [vmem:[#allocation11 + $0x890] sm:$0xff]
    %v876 = vld [vmem:[#allocation11 + $0x898] sm:$0xff]
    %v877 = vld [vmem:[#allocation11 + $0x8a0] sm:$0xff]
    %v878 = vld [vmem:[#allocation11 + $0x8a8] sm:$0xff]
    %v879 = vld [vmem:[#allocation11 + $0x8b0] sm:$0xff]
    %v880 = vld [vmem:[#allocation11 + $0x8b8] sm:$0xff]
    %v881 = vld [vmem:[#allocation11 + $0x8c0] sm:$0xff]
    %v882 = vld [vmem:[#allocation11 + $0x8c8] sm:$0xff]
    %v883 = vld [vmem:[#allocation11 + $0x8d0] sm:$0xff]
    %v884 = vld [vmem:[#allocation11 + $0x8d8] sm:$0xff]
    %v885 = vld [vmem:[#allocation11 + $0x8e0] sm:$0xff]
    %v886 = vld [vmem:[#allocation11 + $0x8e8] sm:$0xff]
    %v887 = vld [vmem:[#allocation11 + $0x8f0] sm:$0xff]
    %v888 = vld [vmem:[#allocation11 + $0x8f8] sm:$0xff]
    %v889 = vld [vmem:[#allocation11 + $0x900] sm:$0xff]
    %v890 = vld [vmem:[#allocation11 + $0x908] sm:$0xff]
    %v891 = vld [vmem:[#allocation11 + $0x910] sm:$0xff]
    %v892 = vld [vmem:[#allocation11 + $0x918] sm:$0xff]
    %v893 = vld [vmem:[#allocation11 + $0x920] sm:$0xff]
    %v894 = vld [vmem:[#allocation11 + $0x928] sm:$0xff]
    %v895 = vld [vmem:[#allocation11 + $0x930] sm:$0xff]
    %v896 = vld [vmem:[#allocation11 + $0x938] sm:$0xff]
    %v897 = vld [vmem:[#allocation11 + $0x940] sm:$0xff]
    %v898 = vld [vmem:[#allocation11 + $0x948] sm:$0xff]
    %v899 = vld [vmem:[#allocation11 + $0x950] sm:$0xff]
    %v900 = vld [vmem:[#allocation11 + $0x958] sm:$0xff]
    %v901 = vld [vmem:[#allocation11 + $0x960] sm:$0xff]
    %v902 = vld [vmem:[#allocation11 + $0x968] sm:$0xff]
    %v903 = vld [vmem:[#allocation11 + $0x970] sm:$0xff]
    %v904 = vld [vmem:[#allocation11 + $0x978] sm:$0xff]
    %v905 = vld [vmem:[#allocation11 + $0x980] sm:$0xff]
    %v906 = vld [vmem:[#allocation11 + $0x988] sm:$0xff]
    %v907 = vld [vmem:[#allocation11 + $0x990] sm:$0xff]
    %v908 = vld [vmem:[#allocation11 + $0x998] sm:$0xff]
    %v909 = vld [vmem:[#allocation11 + $0x9a0] sm:$0xff]
    %v910 = vld [vmem:[#allocation11 + $0x9a8] sm:$0xff]
    %v911 = vld [vmem:[#allocation11 + $0x9b0] sm:$0xff]
    %v912 = vld [vmem:[#allocation11 + $0x9b8] sm:$0xff]
    %v913 = vld [vmem:[#allocation11 + $0x9c0] sm:$0xff]
    %v914 = vld [vmem:[#allocation11 + $0x9c8] sm:$0xff]
    %v915 = vld [vmem:[#allocation11 + $0x9d0] sm:$0xff]
    %v916 = vld [vmem:[#allocation11 + $0x9d8] sm:$0xff]
    %v917 = vld [vmem:[#allocation11 + $0x9e0] sm:$0xff]
    %v918 = vld [vmem:[#allocation11 + $0x9e8] sm:$0xff]
    %v919 = vld [vmem:[#allocation11 + $0x9f0] sm:$0xff]
    %v920 = vld [vmem:[#allocation11 + $0x9f8] sm:$0xff]
    %v921 = vld [vmem:[#allocation11 + $0xa00] sm:$0xff]
    %v922 = vld [vmem:[#allocation11 + $0xa08] sm:$0xff]
    %v923 = vld [vmem:[#allocation11 + $0xa10] sm:$0xff]
    %v924 = vld [vmem:[#allocation11 + $0xa18] sm:$0xff]
    %v925 = vld [vmem:[#allocation11 + $0xa20] sm:$0xff]
    %v926 = vld [vmem:[#allocation11 + $0xa28] sm:$0xff]
    %v927 = vld [vmem:[#allocation11 + $0xa30] sm:$0xff]
    %v928 = vld [vmem:[#allocation11 + $0xa38] sm:$0xff]
    %v929 = vld [vmem:[#allocation11 + $0xa40] sm:$0xff]
    %v930 = vld [vmem:[#allocation11 + $0xa48] sm:$0xff]
    %v931 = vld [vmem:[#allocation11 + $0xa50] sm:$0xff]
    %v932 = vld [vmem:[#allocation11 + $0xa58] sm:$0xff]
    %v933 = vld [vmem:[#allocation11 + $0xa60] sm:$0xff]
    %v934 = vld [vmem:[#allocation11 + $0xa68] sm:$0xff]
    %v935 = vld [vmem:[#allocation11 + $0xa70] sm:$0xff]
    %v936 = vld [vmem:[#allocation11 + $0xa78] sm:$0xff]
    %v937 = vld [vmem:[#allocation11 + $0xa80] sm:$0xff]
    %v938 = vld [vmem:[#allocation11 + $0xa88] sm:$0xff]
    %v939 = vld [vmem:[#allocation11 + $0xa90] sm:$0xff]
    %v940 = vld [vmem:[#allocation11 + $0xa98] sm:$0xff]
    %v941 = vld [vmem:[#allocation11 + $0xaa0] sm:$0xff]
    %v942 = vld [vmem:[#allocation11 + $0xaa8] sm:$0xff]
    %v943 = vld [vmem:[#allocation11 + $0xab0] sm:$0xff]
    %v944 = vld [vmem:[#allocation11 + $0xab8] sm:$0xff]
    %v945 = vld [vmem:[#allocation11 + $0xac0] sm:$0xff]
    %v946 = vld [vmem:[#allocation11 + $0xac8] sm:$0xff]
    %v947 = vld [vmem:[#allocation11 + $0xad0] sm:$0xff]
    %v948 = vld [vmem:[#allocation11 + $0xad8] sm:$0xff]
    %v949 = vld [vmem:[#allocation11 + $0xae0] sm:$0xff]
    %v950 = vld [vmem:[#allocation11 + $0xae8] sm:$0xff]
    %v951 = vld [vmem:[#allocation11 + $0xaf0] sm:$0xff]
    %v952 = vld [vmem:[#allocation11 + $0xaf8] sm:$0xff]
    %v953 = vld [vmem:[#allocation11 + $0xb00] sm:$0xff]
    %v954 = vld [vmem:[#allocation11 + $0xb08] sm:$0xff]
    %v955 = vld [vmem:[#allocation11 + $0xb10] sm:$0xff]
    %v956 = vld [vmem:[#allocation11 + $0xb18] sm:$0xff]
    %v957 = vld [vmem:[#allocation11 + $0xb20] sm:$0xff]
    %v958 = vld [vmem:[#allocation11 + $0xb28] sm:$0xff]
    %v959 = vld [vmem:[#allocation11 + $0xb30] sm:$0xff]
    %v960 = vld [vmem:[#allocation11 + $0xb38] sm:$0xff]
    %v961 = vld [vmem:[#allocation11 + $0xb40] sm:$0xff]
    %v962 = vld [vmem:[#allocation11 + $0xb48] sm:$0xff]
    %v963 = vld [vmem:[#allocation11 + $0xb50] sm:$0xff]
    %v964 = vld [vmem:[#allocation11 + $0xb58] sm:$0xff]
    %v965 = vld [vmem:[#allocation11 + $0xb60] sm:$0xff]
    %v966 = vld [vmem:[#allocation11 + $0xb68] sm:$0xff]
    %v967 = vld [vmem:[#allocation11 + $0xb70] sm:$0xff]
    %v968 = vld [vmem:[#allocation11 + $0xb78] sm:$0xff]
    %v969 = vld [vmem:[#allocation11 + $0xb80] sm:$0xff]
    %v970 = vld [vmem:[#allocation11 + $0xb88] sm:$0xff]
    %v971 = vld [vmem:[#allocation11 + $0xb90] sm:$0xff]
    %v972 = vld [vmem:[#allocation11 + $0xb98] sm:$0xff]
    %v973 = vld [vmem:[#allocation11 + $0xba0] sm:$0xff]
    %v974 = vld [vmem:[#allocation11 + $0xba8] sm:$0xff]
    %v975 = vld [vmem:[#allocation11 + $0xbb0] sm:$0xff]
    %v976 = vld [vmem:[#allocation11 + $0xbb8] sm:$0xff]
    %v977 = vld [vmem:[#allocation11 + $0xbc0] sm:$0xff]
    %v978 = vld [vmem:[#allocation11 + $0xbc8] sm:$0xff]
    %v979 = vld [vmem:[#allocation11 + $0xbd0] sm:$0xff]
    %v980 = vld [vmem:[#allocation11 + $0xbd8] sm:$0xff]
    %v981 = vld [vmem:[#allocation11 + $0xbe0] sm:$0xff]
    %v982 = vld [vmem:[#allocation11 + $0xbe8] sm:$0xff]
    %v983 = vld [vmem:[#allocation11 + $0xbf0] sm:$0xff]
    %v984 = vld [vmem:[#allocation11 + $0xbf8] sm:$0xff]
    %v985 = vld [vmem:[#allocation11 + $0xc00] sm:$0xff]
    %v986 = vld [vmem:[#allocation11 + $0xc08] sm:$0xff]
    %v987 = vld [vmem:[#allocation11 + $0xc10] sm:$0xff]
    %v988 = vld [vmem:[#allocation11 + $0xc18] sm:$0xff]
    %v989 = vld [vmem:[#allocation11 + $0xc20] sm:$0xff]
    %v990 = vld [vmem:[#allocation11 + $0xc28] sm:$0xff]
    %v991 = vld [vmem:[#allocation11 + $0xc30] sm:$0xff]
    %v992 = vld [vmem:[#allocation11 + $0xc38] sm:$0xff]
    %v993 = vld [vmem:[#allocation11 + $0xc40] sm:$0xff]
    %v994 = vld [vmem:[#allocation11 + $0xc48] sm:$0xff]
    %v995 = vld [vmem:[#allocation11 + $0xc50] sm:$0xff]
    %v996 = vld [vmem:[#allocation11 + $0xc58] sm:$0xff]
    %v997 = vld [vmem:[#allocation11 + $0xc60] sm:$0xff]
    %v998 = vld [vmem:[#allocation11 + $0xc68] sm:$0xff]
    %v999 = vld [vmem:[#allocation11 + $0xc70] sm:$0xff]
    %v1000 = vld [vmem:[#allocation11 + $0xc78] sm:$0xff]
    %v1001 = vld [vmem:[#allocation11 + $0xc80] sm:$0xff]
    %v1002 = vld [vmem:[#allocation11 + $0xc88] sm:$0xff]
    %v1003 = vld [vmem:[#allocation11 + $0xc90] sm:$0xff]
    %v1004 = vld [vmem:[#allocation11 + $0xc98] sm:$0xff]
    %v1005 = vld [vmem:[#allocation11 + $0xca0] sm:$0xff]
    %v1006 = vld [vmem:[#allocation11 + $0xca8] sm:$0xff]
    %v1007 = vld [vmem:[#allocation11 + $0xcb0] sm:$0xff]
    %v1008 = vld [vmem:[#allocation11 + $0xcb8] sm:$0xff]
    %v1009 = vld [vmem:[#allocation11 + $0xcc0] sm:$0xff]
    %v1010 = vld [vmem:[#allocation11 + $0xcc8] sm:$0xff]
    %v1011 = vld [vmem:[#allocation11 + $0xcd0] sm:$0xff]
    %v1012 = vld [vmem:[#allocation11 + $0xcd8] sm:$0xff]
    %v1013 = vld [vmem:[#allocation11 + $0xce0] sm:$0xff]
    %v1014 = vld [vmem:[#allocation11 + $0xce8] sm:$0xff]
    %v1015 = vld [vmem:[#allocation11 + $0xcf0] sm:$0xff]
    %v1016 = vld [vmem:[#allocation11 + $0xcf8] sm:$0xff]
    %v1017 = vld [vmem:[#allocation11 + $0xd00] sm:$0xff]
    %v1018 = vld [vmem:[#allocation11 + $0xd08] sm:$0xff]
    %v1019 = vld [vmem:[#allocation11 + $0xd10] sm:$0xff]
    %v1020 = vld [vmem:[#allocation11 + $0xd18] sm:$0xff]
    %v1021 = vld [vmem:[#allocation11 + $0xd20] sm:$0xff]
    %v1022 = vld [vmem:[#allocation11 + $0xd28] sm:$0xff]
    %v1023 = vld [vmem:[#allocation11 + $0xd30] sm:$0xff]
    %v1024 = vld [vmem:[#allocation11 + $0xd38] sm:$0xff]
    %v1025 = vld [vmem:[#allocation11 + $0xd40] sm:$0xff]
    %v1026 = vld [vmem:[#allocation11 + $0xd48] sm:$0xff]
    %v1027 = vld [vmem:[#allocation11 + $0xd50] sm:$0xff]
    %v1028 = vld [vmem:[#allocation11 + $0xd58] sm:$0xff]
    %v1029 = vld [vmem:[#allocation11 + $0xd60] sm:$0xff]
    %v1030 = vld [vmem:[#allocation11 + $0xd68] sm:$0xff]
    %v1031 = vld [vmem:[#allocation11 + $0xd70] sm:$0xff]
    %v1032 = vld [vmem:[#allocation11 + $0xd78] sm:$0xff]
    %v1033 = vld [vmem:[#allocation11 + $0xd80] sm:$0xff]
    %v1034 = vld [vmem:[#allocation11 + $0xd88] sm:$0xff]
    %v1035 = vld [vmem:[#allocation11 + $0xd90] sm:$0xff]
    %v1036 = vld [vmem:[#allocation11 + $0xd98] sm:$0xff]
    %v1037 = vld [vmem:[#allocation11 + $0xda0] sm:$0xff]
    %v1038 = vld [vmem:[#allocation11 + $0xda8] sm:$0xff]
    %v1039 = vld [vmem:[#allocation11 + $0xdb0] sm:$0xff]
    %v1040 = vld [vmem:[#allocation11 + $0xdb8] sm:$0xff]
    %v1041 = vld [vmem:[#allocation11 + $0xdc0] sm:$0xff]
    %v1042 = vld [vmem:[#allocation11 + $0xdc8] sm:$0xff]
    %v1043 = vld [vmem:[#allocation11 + $0xdd0] sm:$0xff]
    %v1044 = vld [vmem:[#allocation11 + $0xdd8] sm:$0xff]
    %v1045 = vld [vmem:[#allocation11 + $0xde0] sm:$0xff]
    %v1046 = vld [vmem:[#allocation11 + $0xde8] sm:$0xff]
    %v1047 = vld [vmem:[#allocation11 + $0xdf0] sm:$0xff]
    %v1048 = vld [vmem:[#allocation11 + $0xdf8] sm:$0xff]
    %v1049 = vld [vmem:[#allocation11 + $0xe00] sm:$0xff]
    %v1050 = vld [vmem:[#allocation11 + $0xe08] sm:$0xff]
    %v1051 = vld [vmem:[#allocation11 + $0xe10] sm:$0xff]
    %v1052 = vld [vmem:[#allocation11 + $0xe18] sm:$0xff]
    %v1053 = vld [vmem:[#allocation11 + $0xe20] sm:$0xff]
    %v1054 = vld [vmem:[#allocation11 + $0xe28] sm:$0xff]
    %v1055 = vld [vmem:[#allocation11 + $0xe30] sm:$0xff]
    %v1056 = vld [vmem:[#allocation11 + $0xe38] sm:$0xff]
    %v1057 = vld [vmem:[#allocation11 + $0xe40] sm:$0xff]
    %v1058 = vld [vmem:[#allocation11 + $0xe48] sm:$0xff]
    %v1059 = vld [vmem:[#allocation11 + $0xe50] sm:$0xff]
    %v1060 = vld [vmem:[#allocation11 + $0xe58] sm:$0xff]
    %v1061 = vld [vmem:[#allocation11 + $0xe60] sm:$0xff]
    %v1062 = vld [vmem:[#allocation11 + $0xe68] sm:$0xff]
    %v1063 = vld [vmem:[#allocation11 + $0xe70] sm:$0xff]
    %v1064 = vld [vmem:[#allocation11 + $0xe78] sm:$0xff]
    %v1065 = vld [vmem:[#allocation11 + $0xe80] sm:$0xff]
    %v1066 = vld [vmem:[#allocation11 + $0xe88] sm:$0xff]
    %v1067 = vld [vmem:[#allocation11 + $0xe90] sm:$0xff]
    %v1068 = vld [vmem:[#allocation11 + $0xe98] sm:$0xff]
    %v1069 = vld [vmem:[#allocation11 + $0xea0] sm:$0xff]
    %v1070 = vld [vmem:[#allocation11 + $0xea8] sm:$0xff]
    %v1071 = vld [vmem:[#allocation11 + $0xeb0] sm:$0xff]
    %v1072 = vld [vmem:[#allocation11 + $0xeb8] sm:$0xff]
    %v1073 = vld [vmem:[#allocation11 + $0xec0] sm:$0xff]
    %v1074 = vld [vmem:[#allocation11 + $0xec8] sm:$0xff]
    %v1075 = vld [vmem:[#allocation11 + $0xed0] sm:$0xff]
    %v1076 = vld [vmem:[#allocation11 + $0xed8] sm:$0xff]
    %v1077 = vld [vmem:[#allocation11 + $0xee0] sm:$0xff]
    %v1078 = vld [vmem:[#allocation11 + $0xee8] sm:$0xff]
    %v1079 = vld [vmem:[#allocation11 + $0xef0] sm:$0xff]
    %v1080 = vld [vmem:[#allocation11 + $0xef8] sm:$0xff]
    %v1081 = vld [vmem:[#allocation11 + $0xf00] sm:$0xff]
    %v1082 = vld [vmem:[#allocation11 + $0xf08] sm:$0xff]
    %v1083 = vld [vmem:[#allocation11 + $0xf10] sm:$0xff]
    %v1084 = vld [vmem:[#allocation11 + $0xf18] sm:$0xff]
    %v1085 = vld [vmem:[#allocation11 + $0xf20] sm:$0xff]
    %v1086 = vld [vmem:[#allocation11 + $0xf28] sm:$0xff]
    %v1087 = vld [vmem:[#allocation11 + $0xf30] sm:$0xff]
    %v1088 = vld [vmem:[#allocation11 + $0xf38] sm:$0xff]
    %v1089 = vld [vmem:[#allocation11 + $0xf40] sm:$0xff]
    %v1090 = vld [vmem:[#allocation11 + $0xf48] sm:$0xff]
    %v1091 = vld [vmem:[#allocation11 + $0xf50] sm:$0xff]
    %v1092 = vld [vmem:[#allocation11 + $0xf58] sm:$0xff]
    %v1093 = vld [vmem:[#allocation11 + $0xf60] sm:$0xff]
    %v1094 = vld [vmem:[#allocation11 + $0xf68] sm:$0xff]
    %v1095 = vld [vmem:[#allocation11 + $0xf70] sm:$0xff]
    %v1096 = vld [vmem:[#allocation11 + $0xf78] sm:$0xff]
    %v1097 = vld [vmem:[#allocation11 + $0xf80] sm:$0xff]
    %v1098 = vld [vmem:[#allocation11 + $0xf88] sm:$0xff]
    %v1099 = vld [vmem:[#allocation11 + $0xf90] sm:$0xff]
    %v1100 = vld [vmem:[#allocation11 + $0xf98] sm:$0xff]
    %v1101 = vld [vmem:[#allocation11 + $0xfa0] sm:$0xff]
    %v1102 = vld [vmem:[#allocation11 + $0xfa8] sm:$0xff]
    %v1103 = vld [vmem:[#allocation11 + $0xfb0] sm:$0xff]
    %v1104 = vld [vmem:[#allocation11 + $0xfb8] sm:$0xff]
    %v1105 = vld [vmem:[#allocation11 + $0xfc0] sm:$0xff]
    %v1106 = vld [vmem:[#allocation11 + $0xfc8] sm:$0xff]
    %v1107 = vld [vmem:[#allocation11 + $0xfd0] sm:$0xff]
    %v1108 = vld [vmem:[#allocation11 + $0xfd8] sm:$0xff]
    %v1109 = vld [vmem:[#allocation11 + $0xfe0] sm:$0xff]
    %v1110 = vld [vmem:[#allocation11 + $0xfe8] sm:$0xff]
    %v1111 = vld [vmem:[#allocation11 + $0xff0] sm:$0xff]
    %v1112 = vld [vmem:[#allocation11 + $0xff8] sm:$0xff]
    %v1113 = vld [vmem:[#allocation13] sm:$0xff]
    %v1115 = vlaneseq
    %v1116 = vshrl.u32 %v1115, 7
    %v1117 = vsub.s32 0, %v1116
    %v1118 = vrot.slane %v1113, %v1117
    %v1119 = vlaneseq
    %v1120 = vshrl.u32 %v1119, 7
    %v1121 = vsub.s32 1, %v1120
    %v1122 = vrot.slane %v1113, %v1121
    %v1123 = vlaneseq
    %v1124 = vshrl.u32 %v1123, 7
    %v1125 = vsub.s32 2, %v1124
    %v1126 = vrot.slane %v1113, %v1125
    %v1127 = vlaneseq
    %v1128 = vshrl.u32 %v1127, 7
    %v1129 = vsub.s32 3, %v1128
    %v1130 = vrot.slane %v1113, %v1129
    %v1131 = vlaneseq
    %v1132 = vshrl.u32 %v1131, 7
    %v1133 = vsub.s32 4, %v1132
    %v1134 = vrot.slane %v1113, %v1133
    %v1135 = vlaneseq
    %v1136 = vshrl.u32 %v1135, 7
    %v1137 = vsub.s32 5, %v1136
    %v1138 = vrot.slane %v1113, %v1137
    %v1139 = vlaneseq
    %v1140 = vshrl.u32 %v1139, 7
    %v1141 = vsub.s32 6, %v1140
    %v1142 = vrot.slane %v1113, %v1141
    %v1143 = vlaneseq
    %v1144 = vshrl.u32 %v1143, 7
    %v1145 = vsub.s32 7, %v1144
    %v1146 = vrot.slane %v1113, %v1145
    %1155 = vmatprep.subr.mxu0 %v602
    %1156 = vmatpush1.msra.mxu0 %v601
    %1157 = vmatprep.subr.mxu0 %v610
    %1158 = vmatpush1.msra.mxu0 %v609
    %1159 = vmatprep.subr.mxu0 %v618
    %1160 = vmatpush1.msra.mxu0 %v617
    %1161 = vmatprep.subr.mxu0 %v626
    %1162 = vmatpush1.msra.mxu0 %v625
    %1163 = vmatprep.subr.mxu0 %v634
    %1164 = vmatpush1.msra.mxu0 %v633
    %1165 = vmatprep.subr.mxu0 %v642
    %1166 = vmatpush1.msra.mxu0 %v641
    %1167 = vmatprep.subr.mxu0 %v650
    %1168 = vmatpush1.msra.mxu0 %v649
    %1169 = vmatprep.subr.mxu0 %v658
    %1170 = vmatpush1.msra.mxu0 %v657
    %1171 = vmatprep.subr.mxu0 %v666
    %1172 = vmatpush1.msra.mxu0 %v665
    %1173 = vmatprep.subr.mxu0 %v674
    %1174 = vmatpush1.msra.mxu0 %v673
    %1175 = vmatprep.subr.mxu0 %v682
    %1176 = vmatpush1.msra.mxu0 %v681
    %1177 = vmatprep.subr.mxu0 %v690
    %1178 = vmatpush1.msra.mxu0 %v689
    %1179 = vmatprep.subr.mxu0 %v698
    %1180 = vmatpush1.msra.mxu0 %v697
    %1181 = vmatprep.subr.mxu0 %v706
    %1182 = vmatpush1.msra.mxu0 %v705
    %1183 = vmatprep.subr.mxu0 %v714
    %1184 = vmatpush1.msra.mxu0 %v713
    %1185 = vmatprep.subr.mxu0 %v722
    %1186 = vmatpush1.msra.mxu0 %v721
    %1187 = vmatprep.subr.mxu0 %v730
    %1188 = vmatpush1.msra.mxu0 %v729
    %1189 = vmatprep.subr.mxu0 %v738
    %1190 = vmatpush1.msra.mxu0 %v737
    %1191 = vmatprep.subr.mxu0 %v746
    %1192 = vmatpush1.msra.mxu0 %v745
    %1193 = vmatprep.subr.mxu0 %v754
    %1194 = vmatpush1.msra.mxu0 %v753
    %1195 = vmatprep.subr.mxu0 %v762
    %1196 = vmatpush1.msra.mxu0 %v761
    %1197 = vmatprep.subr.mxu0 %v770
    %1198 = vmatpush1.msra.mxu0 %v769
    %1199 = vmatprep.subr.mxu0 %v778
    %1200 = vmatpush1.msra.mxu0 %v777
    %1201 = vmatprep.subr.mxu0 %v786
    %1202 = vmatpush1.msra.mxu0 %v785
    %1203 = vmatprep.subr.mxu0 %v794
    %1204 = vmatpush1.msra.mxu0 %v793
    %1205 = vmatprep.subr.mxu0 %v802
    %1206 = vmatpush1.msra.mxu0 %v801
    %1207 = vmatprep.subr.mxu0 %v810
    %1208 = vmatpush1.msra.mxu0 %v809
    %1209 = vmatprep.subr.mxu0 %v818
    %1210 = vmatpush1.msra.mxu0 %v817
    %1211 = vmatprep.subr.mxu0 %v826
    %1212 = vmatpush1.msra.mxu0 %v825
    %1213 = vmatprep.subr.mxu0 %v834
    %1214 = vmatpush1.msra.mxu0 %v833
    %1215 = vmatprep.subr.mxu0 %v842
    %1216 = vmatpush1.msra.mxu0 %v841
    %1217 = vmatprep.subr.mxu0 %v850
    %1218 = vmatpush1.msra.mxu0 %v849
    %1219 = vmatprep.mubr.f32.mxu0 %v594
    %1220 = vmatmul.mubr.f32.gmra.mrb[0].mxu0 %v593
    %v1221 = vpop.f32.mrb[0].mxu0
    %v1222 = vadd.f32 %v1118, %v1221
    %v1223 = vpop.f32.mrb[0].mxu0
    %v1224 = vadd.f32 %v1122, %v1223
    %1225 = vmatprep.mubr.f32.mxu0 %v598
    %1226 = vmatmul.mubr.f32.gmra.mrb[0].mxu0 %v597
    %v1227 = vpop.f32.mrb[0].mxu0
    %v1228 = vadd.f32 %v1118, %v1227
    %v1229 = vpop.f32.mrb[0].mxu0
    %v1230 = vadd.f32 %v1122, %v1229
    %1231 = vdwg.mxu0
    %1232 = vmatprep.subr.mxu0 %v858
    %1233 = vmatpush1.msra.mxu0 %v857
    %1234 = vmatprep.subr.mxu0 %v866
    %1235 = vmatpush1.msra.mxu0 %v865
    %1236 = vmatprep.subr.mxu0 %v874
    %1237 = vmatpush1.msra.mxu0 %v873
    %1238 = vmatprep.subr.mxu0 %v882
    %1239 = vmatpush1.msra.mxu0 %v881
    %1240 = vmatprep.subr.mxu0 %v890
    %1241 = vmatpush1.msra.mxu0 %v889
    %1242 = vmatprep.subr.mxu0 %v898
    %1243 = vmatpush1.msra.mxu0 %v897
    %1244 = vmatprep.subr.mxu0 %v906
    %1245 = vmatpush1.msra.mxu0 %v905
    %1246 = vmatprep.subr.mxu0 %v914
    %1247 = vmatpush1.msra.mxu0 %v913
    %1248 = vmatprep.subr.mxu0 %v922
    %1249 = vmatpush1.msra.mxu0 %v921
    %1250 = vmatprep.subr.mxu0 %v930
    %1251 = vmatpush1.msra.mxu0 %v929
    %1252 = vmatprep.subr.mxu0 %v938
    %1253 = vmatpush1.msra.mxu0 %v937
    %1254 = vmatprep.subr.mxu0 %v946
    %1255 = vmatpush1.msra.mxu0 %v945
    %1256 = vmatprep.subr.mxu0 %v954
    %1257 = vmatpush1.msra.mxu0 %v953
    %1258 = vmatprep.subr.mxu0 %v962
    %1259 = vmatpush1.msra.mxu0 %v961
    %1260 = vmatprep.subr.mxu0 %v970
    %1261 = vmatpush1.msra.mxu0 %v969
    %1262 = vmatprep.subr.mxu0 %v978
    %1263 = vmatpush1.msra.mxu0 %v977
    %1264 = vmatprep.subr.mxu0 %v986
    %1265 = vmatpush1.msra.mxu0 %v985
    %1266 = vmatprep.subr.mxu0 %v994
    %1267 = vmatpush1.msra.mxu0 %v993
    %1268 = vmatprep.subr.mxu0 %v1002
    %1269 = vmatpush1.msra.mxu0 %v1001
    %1270 = vmatprep.subr.mxu0 %v1010
    %1271 = vmatpush1.msra.mxu0 %v1009
    %1272 = vmatprep.subr.mxu0 %v1018
    %1273 = vmatpush1.msra.mxu0 %v1017
    %1274 = vmatprep.subr.mxu0 %v1026
    %1275 = vmatpush1.msra.mxu0 %v1025
    %1276 = vmatprep.subr.mxu0 %v1034
    %1277 = vmatpush1.msra.mxu0 %v1033
    %1278 = vmatprep.subr.mxu0 %v1042
    %1279 = vmatpush1.msra.mxu0 %v1041
    %1280 = vmatprep.subr.mxu0 %v1050
    %1281 = vmatpush1.msra.mxu0 %v1049
    %1282 = vmatprep.subr.mxu0 %v1058
    %1283 = vmatpush1.msra.mxu0 %v1057
    %1284 = vmatprep.subr.mxu0 %v1066
    %1285 = vmatpush1.msra.mxu0 %v1065
    %1286 = vmatprep.subr.mxu0 %v1074
    %1287 = vmatpush1.msra.mxu0 %v1073
    %1288 = vmatprep.subr.mxu0 %v1082
    %1289 = vmatpush1.msra.mxu0 %v1081
    %1290 = vmatprep.subr.mxu0 %v1090
    %1291 = vmatpush1.msra.mxu0 %v1089
    %1292 = vmatprep.subr.mxu0 %v1098
    %1293 = vmatpush1.msra.mxu0 %v1097
    %1294 = vmatprep.subr.mxu0 %v1106
    %1295 = vmatpush1.msra.mxu0 %v1105
    %1296 = vmatprep.mubr.f32.mxu0 %v596
    %1297 = vmatmul.mubr.f32.gmra.mrb[0].mxu0 %v595
    %v1298 = vpop.f32.mrb[0].mxu0
    %v1299 = vadd.f32 %v1222, %v1298
    %v1300 = vpop.f32.mrb[0].mxu0
    %v1301 = vadd.f32 %v1224, %v1300
    %1302 = vmatprep.mubr.f32.mxu0 %v600
    %1303 = vmatmul.mubr.f32.gmra.mrb[0].mxu0 %v599
    %v1304 = vpop.f32.mrb[0].mxu0
    %v1305 = vadd.f32 %v1228, %v1304
    %v1306 = vpop.f32.mrb[0].mxu0
    %v1307 = vadd.f32 %v1230, %v1306
    %1308 = vdwg.mxu0
    %1309 = vmatprep.subr.mxu0 %v604
    %1310 = vmatpush1.msra.mxu0 %v603
    %1311 = vmatprep.subr.mxu0 %v612
    %1312 = vmatpush1.msra.mxu0 %v611
    %1313 = vmatprep.subr.mxu0 %v620
    %1314 = vmatpush1.msra.mxu0 %v619
    %1315 = vmatprep.subr.mxu0 %v628
    %1316 = vmatpush1.msra.mxu0 %v627
    %1317 = vmatprep.subr.mxu0 %v636
    %1318 = vmatpush1.msra.mxu0 %v635
    %1319 = vmatprep.subr.mxu0 %v644
    %1320 = vmatpush1.msra.mxu0 %v643
    %1321 = vmatprep.subr.mxu0 %v652
    %1322 = vmatpush1.msra.mxu0 %v651
    %1323 = vmatprep.subr.mxu0 %v660
    %1324 = vmatpush1.msra.mxu0 %v659
    %1325 = vmatprep.subr.mxu0 %v668
    %1326 = vmatpush1.msra.mxu0 %v667
    %1327 = vmatprep.subr.mxu0 %v676
    %1328 = vmatpush1.msra.mxu0 %v675
    %1329 = vmatprep.subr.mxu0 %v684
    %1330 = vmatpush1.msra.mxu0 %v683
    %1331 = vmatprep.subr.mxu0 %v692
    %1332 = vmatpush1.msra.mxu0 %v691
    %1333 = vmatprep.subr.mxu0 %v700
    %1334 = vmatpush1.msra.mxu0 %v699
    %1335 = vmatprep.subr.mxu0 %v708
    %1336 = vmatpush1.msra.mxu0 %v707
    %1337 = vmatprep.subr.mxu0 %v716
    %1338 = vmatpush1.msra.mxu0 %v715
    %1339 = vmatprep.subr.mxu0 %v724
    %1340 = vmatpush1.msra.mxu0 %v723
    %1341 = vmatprep.subr.mxu0 %v732
    %1342 = vmatpush1.msra.mxu0 %v731
    %1343 = vmatprep.subr.mxu0 %v740
    %1344 = vmatpush1.msra.mxu0 %v739
    %1345 = vmatprep.subr.mxu0 %v748
    %1346 = vmatpush1.msra.mxu0 %v747
    %1347 = vmatprep.subr.mxu0 %v756
    %1348 = vmatpush1.msra.mxu0 %v755
    %1349 = vmatprep.subr.mxu0 %v764
    %1350 = vmatpush1.msra.mxu0 %v763
    %1351 = vmatprep.subr.mxu0 %v772
    %1352 = vmatpush1.msra.mxu0 %v771
    %1353 = vmatprep.subr.mxu0 %v780
    %1354 = vmatpush1.msra.mxu0 %v779
    %1355 = vmatprep.subr.mxu0 %v788
    %1356 = vmatpush1.msra.mxu0 %v787
    %1357 = vmatprep.subr.mxu0 %v796
    %1358 = vmatpush1.msra.mxu0 %v795
    %1359 = vmatprep.subr.mxu0 %v804
    %1360 = vmatpush1.msra.mxu0 %v803
    %1361 = vmatprep.subr.mxu0 %v812
    %1362 = vmatpush1.msra.mxu0 %v811
    %1363 = vmatprep.subr.mxu0 %v820
    %1364 = vmatpush1.msra.mxu0 %v819
    %1365 = vmatprep.subr.mxu0 %v828
    %1366 = vmatpush1.msra.mxu0 %v827
    %1367 = vmatprep.subr.mxu0 %v836
    %1368 = vmatpush1.msra.mxu0 %v835
    %1369 = vmatprep.subr.mxu0 %v844
    %1370 = vmatpush1.msra.mxu0 %v843
    %1371 = vmatprep.subr.mxu0 %v852
    %1372 = vmatpush1.msra.mxu0 %v851
    %1373 = vmatprep.mubr.f32.mxu0 %v594
    %1374 = vmatmul.mubr.f32.gmra.mrb[0].mxu0 %v593
    %v1375 = vpop.f32.mrb[0].mxu0
    %v1376 = vadd.f32 %v1126, %v1375
    %v1377 = vpop.f32.mrb[0].mxu0
    %v1378 = vadd.f32 %v1130, %v1377
    %1379 = vmatprep.mubr.f32.mxu0 %v598
    %1380 = vmatmul.mubr.f32.gmra.mrb[0].mxu0 %v597
    %v1381 = vpop.f32.mrb[0].mxu0
    %v1382 = vadd.f32 %v1126, %v1381
    %v1383 = vpop.f32.mrb[0].mxu0
    %v1384 = vadd.f32 %v1130, %v1383
    %1385 = vdwg.mxu0
    %1386 = vmatprep.subr.mxu0 %v860
    %1387 = vmatpush1.msra.mxu0 %v859
    %1388 = vmatprep.subr.mxu0 %v868
    %1389 = vmatpush1.msra.mxu0 %v867
    %1390 = vmatprep.subr.mxu0 %v876
    %1391 = vmatpush1.msra.mxu0 %v875
    %1392 = vmatprep.subr.mxu0 %v884
    %1393 = vmatpush1.msra.mxu0 %v883
    %1394 = vmatprep.subr.mxu0 %v892
    %1395 = vmatpush1.msra.mxu0 %v891
    %1396 = vmatprep.subr.mxu0 %v900
    %1397 = vmatpush1.msra.mxu0 %v899
    %1398 = vmatprep.subr.mxu0 %v908
    %1399 = vmatpush1.msra.mxu0 %v907
    %1400 = vmatprep.subr.mxu0 %v916
    %1401 = vmatpush1.msra.mxu0 %v915
    %1402 = vmatprep.subr.mxu0 %v924
    %1403 = vmatpush1.msra.mxu0 %v923
    %1404 = vmatprep.subr.mxu0 %v932
    %1405 = vmatpush1.msra.mxu0 %v931
    %1406 = vmatprep.subr.mxu0 %v940
    %1407 = vmatpush1.msra.mxu0 %v939
    %1408 = vmatprep.subr.mxu0 %v948
    %1409 = vmatpush1.msra.mxu0 %v947
    %1410 = vmatprep.subr.mxu0 %v956
    %1411 = vmatpush1.msra.mxu0 %v955
    %1412 = vmatprep.subr.mxu0 %v964
    %1413 = vmatpush1.msra.mxu0 %v963
    %1414 = vmatprep.subr.mxu0 %v972
    %1415 = vmatpush1.msra.mxu0 %v971
    %1416 = vmatprep.subr.mxu0 %v980
    %1417 = vmatpush1.msra.mxu0 %v979
    %1418 = vmatprep.subr.mxu0 %v988
    %1419 = vmatpush1.msra.mxu0 %v987
    %1420 = vmatprep.subr.mxu0 %v996
    %1421 = vmatpush1.msra.mxu0 %v995
    %1422 = vmatprep.subr.mxu0 %v1004
    %1423 = vmatpush1.msra.mxu0 %v1003
    %1424 = vmatprep.subr.mxu0 %v1012
    %1425 = vmatpush1.msra.mxu0 %v1011
    %1426 = vmatprep.subr.mxu0 %v1020
    %1427 = vmatpush1.msra.mxu0 %v1019
    %1428 = vmatprep.subr.mxu0 %v1028
    %1429 = vmatpush1.msra.mxu0 %v1027
    %1430 = vmatprep.subr.mxu0 %v1036
    %1431 = vmatpush1.msra.mxu0 %v1035
    %1432 = vmatprep.subr.mxu0 %v1044
    %1433 = vmatpush1.msra.mxu0 %v1043
    %1434 = vmatprep.subr.mxu0 %v1052
    %1435 = vmatpush1.msra.mxu0 %v1051
    %1436 = vmatprep.subr.mxu0 %v1060
    %1437 = vmatpush1.msra.mxu0 %v1059
    %1438 = vmatprep.subr.mxu0 %v1068
    %1439 = vmatpush1.msra.mxu0 %v1067
    %1440 = vmatprep.subr.mxu0 %v1076
    %1441 = vmatpush1.msra.mxu0 %v1075
    %1442 = vmatprep.subr.mxu0 %v1084
    %1443 = vmatpush1.msra.mxu0 %v1083
    %1444 = vmatprep.subr.mxu0 %v1092
    %1445 = vmatpush1.msra.mxu0 %v1091
    %1446 = vmatprep.subr.mxu0 %v1100
    %1447 = vmatpush1.msra.mxu0 %v1099
    %1448 = vmatprep.subr.mxu0 %v1108
    %1449 = vmatpush1.msra.mxu0 %v1107
    %1450 = vmatprep.mubr.f32.mxu0 %v596
    %1451 = vmatmul.mubr.f32.gmra.mrb[0].mxu0 %v595
    %v1452 = vpop.f32.mrb[0].mxu0
    %v1453 = vadd.f32 %v1376, %v1452
    %v1454 = vpop.f32.mrb[0].mxu0
    %v1455 = vadd.f32 %v1378, %v1454
    %1456 = vmatprep.mubr.f32.mxu0 %v600
    %1457 = vmatmul.mubr.f32.gmra.mrb[0].mxu0 %v599
    %v1458 = vpop.f32.mrb[0].mxu0
    %v1459 = vadd.f32 %v1382, %v1458
    %v1460 = vpop.f32.mrb[0].mxu0
    %v1461 = vadd.f32 %v1384, %v1460
    %1462 = vdwg.mxu0
    %1463 = vmatprep.subr.mxu0 %v606
    %1464 = vmatpush1.msra.mxu0 %v605
    %1465 = vmatprep.subr.mxu0 %v614
    %1466 = vmatpush1.msra.mxu0 %v613
    %1467 = vmatprep.subr.mxu0 %v622
    %1468 = vmatpush1.msra.mxu0 %v621
    %1469 = vmatprep.subr.mxu0 %v630
    %1470 = vmatpush1.msra.mxu0 %v629
    %1471 = vmatprep.subr.mxu0 %v638
    %1472 = vmatpush1.msra.mxu0 %v637
    %1473 = vmatprep.subr.mxu0 %v646
    %1474 = vmatpush1.msra.mxu0 %v645
    %1475 = vmatprep.subr.mxu0 %v654
    %1476 = vmatpush1.msra.mxu0 %v653
    %1477 = vmatprep.subr.mxu0 %v662
    %1478 = vmatpush1.msra.mxu0 %v661
    %1479 = vmatprep.subr.mxu0 %v670
    %1480 = vmatpush1.msra.mxu0 %v669
    %1481 = vmatprep.subr.mxu0 %v678
    %1482 = vmatpush1.msra.mxu0 %v677
    %1483 = vmatprep.subr.mxu0 %v686
    %1484 = vmatpush1.msra.mxu0 %v685
    %1485 = vmatprep.subr.mxu0 %v694
    %1486 = vmatpush1.msra.mxu0 %v693
    %1487 = vmatprep.subr.mxu0 %v702
    %1488 = vmatpush1.msra.mxu0 %v701
    %1489 = vmatprep.subr.mxu0 %v710
    %1490 = vmatpush1.msra.mxu0 %v709
    %1491 = vmatprep.subr.mxu0 %v718
    %1492 = vmatpush1.msra.mxu0 %v717
    %1493 = vmatprep.subr.mxu0 %v726
    %1494 = vmatpush1.msra.mxu0 %v725
    %1495 = vmatprep.subr.mxu0 %v734
    %1496 = vmatpush1.msra.mxu0 %v733
    %1497 = vmatprep.subr.mxu0 %v742
    %1498 = vmatpush1.msra.mxu0 %v741
    %1499 = vmatprep.subr.mxu0 %v750
    %1500 = vmatpush1.msra.mxu0 %v749
    %1501 = vmatprep.subr.mxu0 %v758
    %1502 = vmatpush1.msra.mxu0 %v757
    %1503 = vmatprep.subr.mxu0 %v766
    %1504 = vmatpush1.msra.mxu0 %v765
    %1505 = vmatprep.subr.mxu0 %v774
    %1506 = vmatpush1.msra.mxu0 %v773
    %1507 = vmatprep.subr.mxu0 %v782
    %1508 = vmatpush1.msra.mxu0 %v781
    %1509 = vmatprep.subr.mxu0 %v790
    %1510 = vmatpush1.msra.mxu0 %v789
    %1511 = vmatprep.subr.mxu0 %v798
    %1512 = vmatpush1.msra.mxu0 %v797
    %1513 = vmatprep.subr.mxu0 %v806
    %1514 = vmatpush1.msra.mxu0 %v805
    %1515 = vmatprep.subr.mxu0 %v814
    %1516 = vmatpush1.msra.mxu0 %v813
    %1517 = vmatprep.subr.mxu0 %v822
    %1518 = vmatpush1.msra.mxu0 %v821
    %1519 = vmatprep.subr.mxu0 %v830
    %1520 = vmatpush1.msra.mxu0 %v829
    %1521 = vmatprep.subr.mxu0 %v838
    %1522 = vmatpush1.msra.mxu0 %v837
    %1523 = vmatprep.subr.mxu0 %v846
    %1524 = vmatpush1.msra.mxu0 %v845
    %1525 = vmatprep.subr.mxu0 %v854
    %1526 = vmatpush1.msra.mxu0 %v853
    %1527 = vmatprep.mubr.f32.mxu0 %v594
    %1528 = vmatmul.mubr.f32.gmra.mrb[0].mxu0 %v593
    %v1529 = vpop.f32.mrb[0].mxu0
    %v1530 = vadd.f32 %v1134, %v1529
    %v1531 = vpop.f32.mrb[0].mxu0
    %v1532 = vadd.f32 %v1138, %v1531
    %1533 = vmatprep.mubr.f32.mxu0 %v598
    %1534 = vmatmul.mubr.f32.gmra.mrb[0].mxu0 %v597
    %v1535 = vpop.f32.mrb[0].mxu0
    %v1536 = vadd.f32 %v1134, %v1535
    %v1537 = vpop.f32.mrb[0].mxu0
    %v1538 = vadd.f32 %v1138, %v1537
    %1539 = vdwg.mxu0
    %1540 = vmatprep.subr.mxu0 %v862
    %1541 = vmatpush1.msra.mxu0 %v861
    %1542 = vmatprep.subr.mxu0 %v870
    %1543 = vmatpush1.msra.mxu0 %v869
    %1544 = vmatprep.subr.mxu0 %v878
    %1545 = vmatpush1.msra.mxu0 %v877
    %1546 = vmatprep.subr.mxu0 %v886
    %1547 = vmatpush1.msra.mxu0 %v885
    %1548 = vmatprep.subr.mxu0 %v894
    %1549 = vmatpush1.msra.mxu0 %v893
    %1550 = vmatprep.subr.mxu0 %v902
    %1551 = vmatpush1.msra.mxu0 %v901
    %1552 = vmatprep.subr.mxu0 %v910
    %1553 = vmatpush1.msra.mxu0 %v909
    %1554 = vmatprep.subr.mxu0 %v918
    %1555 = vmatpush1.msra.mxu0 %v917
    %1556 = vmatprep.subr.mxu0 %v926
    %1557 = vmatpush1.msra.mxu0 %v925
    %1558 = vmatprep.subr.mxu0 %v934
    %1559 = vmatpush1.msra.mxu0 %v933
    %1560 = vmatprep.subr.mxu0 %v942
    %1561 = vmatpush1.msra.mxu0 %v941
    %1562 = vmatprep.subr.mxu0 %v950
    %1563 = vmatpush1.msra.mxu0 %v949
    %1564 = vmatprep.subr.mxu0 %v958
    %1565 = vmatpush1.msra.mxu0 %v957
    %1566 = vmatprep.subr.mxu0 %v966
    %1567 = vmatpush1.msra.mxu0 %v965
    %1568 = vmatprep.subr.mxu0 %v974
    %1569 = vmatpush1.msra.mxu0 %v973
    %1570 = vmatprep.subr.mxu0 %v982
    %1571 = vmatpush1.msra.mxu0 %v981
    %1572 = vmatprep.subr.mxu0 %v990
    %1573 = vmatpush1.msra.mxu0 %v989
    %1574 = vmatprep.subr.mxu0 %v998
    %1575 = vmatpush1.msra.mxu0 %v997
    %1576 = vmatprep.subr.mxu0 %v1006
    %1577 = vmatpush1.msra.mxu0 %v1005
    %1578 = vmatprep.subr.mxu0 %v1014
    %1579 = vmatpush1.msra.mxu0 %v1013
    %1580 = vmatprep.subr.mxu0 %v1022
    %1581 = vmatpush1.msra.mxu0 %v1021
    %1582 = vmatprep.subr.mxu0 %v1030
    %1583 = vmatpush1.msra.mxu0 %v1029
    %1584 = vmatprep.subr.mxu0 %v1038
    %1585 = vmatpush1.msra.mxu0 %v1037
    %1586 = vmatprep.subr.mxu0 %v1046
    %1587 = vmatpush1.msra.mxu0 %v1045
    %1588 = vmatprep.subr.mxu0 %v1054
    %1589 = vmatpush1.msra.mxu0 %v1053
    %1590 = vmatprep.subr.mxu0 %v1062
    %1591 = vmatpush1.msra.mxu0 %v1061
    %1592 = vmatprep.subr.mxu0 %v1070
    %1593 = vmatpush1.msra.mxu0 %v1069
    %1594 = vmatprep.subr.mxu0 %v1078
    %1595 = vmatpush1.msra.mxu0 %v1077
    %1596 = vmatprep.subr.mxu0 %v1086
    %1597 = vmatpush1.msra.mxu0 %v1085
    %1598 = vmatprep.subr.mxu0 %v1094
    %1599 = vmatpush1.msra.mxu0 %v1093
    %1600 = vmatprep.subr.mxu0 %v1102
    %1601 = vmatpush1.msra.mxu0 %v1101
    %1602 = vmatprep.subr.mxu0 %v1110
    %1603 = vmatpush1.msra.mxu0 %v1109
    %1604 = vmatprep.mubr.f32.mxu0 %v596
    %1605 = vmatmul.mubr.f32.gmra.mrb[0].mxu0 %v595
    %v1606 = vpop.f32.mrb[0].mxu0
    %v1607 = vadd.f32 %v1530, %v1606
    %v1608 = vpop.f32.mrb[0].mxu0
    %v1609 = vadd.f32 %v1532, %v1608
    %1610 = vmatprep.mubr.f32.mxu0 %v600
    %1611 = vmatmul.mubr.f32.gmra.mrb[0].mxu0 %v599
    %v1612 = vpop.f32.mrb[0].mxu0
    %v1613 = vadd.f32 %v1536, %v1612
    %v1614 = vpop.f32.mrb[0].mxu0
    %v1615 = vadd.f32 %v1538, %v1614
    %1616 = vdwg.mxu0
    %1617 = vmatprep.subr.mxu0 %v608
    %1618 = vmatpush1.msra.mxu0 %v607
    %1619 = vmatprep.subr.mxu0 %v616
    %1620 = vmatpush1.msra.mxu0 %v615
    %1621 = vmatprep.subr.mxu0 %v624
    %1622 = vmatpush1.msra.mxu0 %v623
    %1623 = vmatprep.subr.mxu0 %v632
    %1624 = vmatpush1.msra.mxu0 %v631
    %1625 = vmatprep.subr.mxu0 %v640
    %1626 = vmatpush1.msra.mxu0 %v639
    %1627 = vmatprep.subr.mxu0 %v648
    %1628 = vmatpush1.msra.mxu0 %v647
    %1629 = vmatprep.subr.mxu0 %v656
    %1630 = vmatpush1.msra.mxu0 %v655
    %1631 = vmatprep.subr.mxu0 %v664
    %1632 = vmatpush1.msra.mxu0 %v663
    %1633 = vmatprep.subr.mxu0 %v672
    %1634 = vmatpush1.msra.mxu0 %v671
    %1635 = vmatprep.subr.mxu0 %v680
    %1636 = vmatpush1.msra.mxu0 %v679
    %1637 = vmatprep.subr.mxu0 %v688
    %1638 = vmatpush1.msra.mxu0 %v687
    %1639 = vmatprep.subr.mxu0 %v696
    %1640 = vmatpush1.msra.mxu0 %v695
    %1641 = vmatprep.subr.mxu0 %v704
    %1642 = vmatpush1.msra.mxu0 %v703
    %1643 = vmatprep.subr.mxu0 %v712
    %1644 = vmatpush1.msra.mxu0 %v711
    %1645 = vmatprep.subr.mxu0 %v720
    %1646 = vmatpush1.msra.mxu0 %v719
    %1647 = vmatprep.subr.mxu0 %v728
    %1648 = vmatpush1.msra.mxu0 %v727
    %1649 = vmatprep.subr.mxu0 %v736
    %1650 = vmatpush1.msra.mxu0 %v735
    %1651 = vmatprep.subr.mxu0 %v744
    %1652 = vmatpush1.msra.mxu0 %v743
    %1653 = vmatprep.subr.mxu0 %v752
    %1654 = vmatpush1.msra.mxu0 %v751
    %1655 = vmatprep.subr.mxu0 %v760
    %1656 = vmatpush1.msra.mxu0 %v759
    %1657 = vmatprep.subr.mxu0 %v768
    %1658 = vmatpush1.msra.mxu0 %v767
    %1659 = vmatprep.subr.mxu0 %v776
    %1660 = vmatpush1.msra.mxu0 %v775
    %1661 = vmatprep.subr.mxu0 %v784
    %1662 = vmatpush1.msra.mxu0 %v783
    %1663 = vmatprep.subr.mxu0 %v792
    %1664 = vmatpush1.msra.mxu0 %v791
    %1665 = vmatprep.subr.mxu0 %v800
    %1666 = vmatpush1.msra.mxu0 %v799
    %1667 = vmatprep.subr.mxu0 %v808
    %1668 = vmatpush1.msra.mxu0 %v807
    %1669 = vmatprep.subr.mxu0 %v816
    %1670 = vmatpush1.msra.mxu0 %v815
    %1671 = vmatprep.subr.mxu0 %v824
    %1672 = vmatpush1.msra.mxu0 %v823
    %1673 = vmatprep.subr.mxu0 %v832
    %1674 = vmatpush1.msra.mxu0 %v831
    %1675 = vmatprep.subr.mxu0 %v840
    %1676 = vmatpush1.msra.mxu0 %v839
    %1677 = vmatprep.subr.mxu0 %v848
    %1678 = vmatpush1.msra.mxu0 %v847
    %1679 = vmatprep.subr.mxu0 %v856
    %1680 = vmatpush1.msra.mxu0 %v855
    %1681 = vmatprep.mubr.f32.mxu0 %v594
    %1682 = vmatmul.mubr.f32.gmra.mrb[0].mxu0 %v593
    %v1683 = vpop.f32.mrb[0].mxu0
    %v1684 = vadd.f32 %v1142, %v1683
    %v1685 = vpop.f32.mrb[0].mxu0
    %v1686 = vadd.f32 %v1146, %v1685
    %1687 = vmatprep.mubr.f32.mxu0 %v598
    %1688 = vmatmul.mubr.f32.gmra.mrb[0].mxu0 %v597
    %v1689 = vpop.f32.mrb[0].mxu0
    %v1690 = vadd.f32 %v1142, %v1689
    %v1691 = vpop.f32.mrb[0].mxu0
    %v1692 = vadd.f32 %v1146, %v1691
    %1693 = vdwg.mxu0
    %1694 = vmatprep.subr.mxu0 %v864
    %1695 = vmatpush1.msra.mxu0 %v863
    %1696 = vmatprep.subr.mxu0 %v872
    %1697 = vmatpush1.msra.mxu0 %v871
    %1698 = vmatprep.subr.mxu0 %v880
    %1699 = vmatpush1.msra.mxu0 %v879
    %1700 = vmatprep.subr.mxu0 %v888
    %1701 = vmatpush1.msra.mxu0 %v887
    %1702 = vmatprep.subr.mxu0 %v896
    %1703 = vmatpush1.msra.mxu0 %v895
    %1704 = vmatprep.subr.mxu0 %v904
    %1705 = vmatpush1.msra.mxu0 %v903
    %1706 = vmatprep.subr.mxu0 %v912
    %1707 = vmatpush1.msra.mxu0 %v911
    %1708 = vmatprep.subr.mxu0 %v920
    %1709 = vmatpush1.msra.mxu0 %v919
    %1710 = vmatprep.subr.mxu0 %v928
    %1711 = vmatpush1.msra.mxu0 %v927
    %1712 = vmatprep.subr.mxu0 %v936
    %1713 = vmatpush1.msra.mxu0 %v935
    %1714 = vmatprep.subr.mxu0 %v944
    %1715 = vmatpush1.msra.mxu0 %v943
    %1716 = vmatprep.subr.mxu0 %v952
    %1717 = vmatpush1.msra.mxu0 %v951
    %1718 = vmatprep.subr.mxu0 %v960
    %1719 = vmatpush1.msra.mxu0 %v959
    %1720 = vmatprep.subr.mxu0 %v968
    %1721 = vmatpush1.msra.mxu0 %v967
    %1722 = vmatprep.subr.mxu0 %v976
    %1723 = vmatpush1.msra.mxu0 %v975
    %1724 = vmatprep.subr.mxu0 %v984
    %1725 = vmatpush1.msra.mxu0 %v983
    %1726 = vmatprep.subr.mxu0 %v992
    %1727 = vmatpush1.msra.mxu0 %v991
    %1728 = vmatprep.subr.mxu0 %v1000
    %1729 = vmatpush1.msra.mxu0 %v999
    %1730 = vmatprep.subr.mxu0 %v1008
    %1731 = vmatpush1.msra.mxu0 %v1007
    %1732 = vmatprep.subr.mxu0 %v1016
    %1733 = vmatpush1.msra.mxu0 %v1015
    %1734 = vmatprep.subr.mxu0 %v1024
    %1735 = vmatpush1.msra.mxu0 %v1023
    %1736 = vmatprep.subr.mxu0 %v1032
    %1737 = vmatpush1.msra.mxu0 %v1031
    %1738 = vmatprep.subr.mxu0 %v1040
    %1739 = vmatpush1.msra.mxu0 %v1039
    %1740 = vmatprep.subr.mxu0 %v1048
    %1741 = vmatpush1.msra.mxu0 %v1047
    %1742 = vmatprep.subr.mxu0 %v1056
    %1743 = vmatpush1.msra.mxu0 %v1055
    %1744 = vmatprep.subr.mxu0 %v1064
    %1745 = vmatpush1.msra.mxu0 %v1063
    %1746 = vmatprep.subr.mxu0 %v1072
    %1747 = vmatpush1.msra.mxu0 %v1071
    %1748 = vmatprep.subr.mxu0 %v1080
    %1749 = vmatpush1.msra.mxu0 %v1079
    %1750 = vmatprep.subr.mxu0 %v1088
    %1751 = vmatpush1.msra.mxu0 %v1087
    %1752 = vmatprep.subr.mxu0 %v1096
    %1753 = vmatpush1.msra.mxu0 %v1095
    %1754 = vmatprep.subr.mxu0 %v1104
    %1755 = vmatpush1.msra.mxu0 %v1103
    %1756 = vmatprep.subr.mxu0 %v1112
    %1757 = vmatpush1.msra.mxu0 %v1111
    %1758 = vmatprep.mubr.f32.mxu0 %v596
    %1759 = vmatmul.mubr.f32.gmra.mrb[0].mxu0 %v595
    %v1760 = vpop.f32.mrb[0].mxu0
    %v1761 = vadd.f32 %v1684, %v1760
    %v1762 = vpop.f32.mrb[0].mxu0
    %v1763 = vadd.f32 %v1686, %v1762
    %1764 = vmatprep.mubr.f32.mxu0 %v600
    %1765 = vmatmul.mubr.f32.gmra.mrb[0].mxu0 %v599
    %v1766 = vpop.f32.mrb[0].mxu0
    %v1767 = vadd.f32 %v1690, %v1766
    %v1768 = vpop.f32.mrb[0].mxu0
    %v1769 = vadd.f32 %v1692, %v1768
    %1770 = vdwg.mxu0
    %vm1771 = vcmp.gt.f32.partialorder %v1299, 0.0
    %vm1772 = vcmp.gt.f32.partialorder %v1301, 0.0
    %vm1773 = vcmp.gt.f32.partialorder %v1453, 0.0
    %vm1774 = vcmp.gt.f32.partialorder %v1455, 0.0
    %vm1775 = vcmp.gt.f32.partialorder %v1607, 0.0
    %vm1776 = vcmp.gt.f32.partialorder %v1609, 0.0
    %vm1777 = vcmp.gt.f32.partialorder %v1761, 0.0
    %vm1778 = vcmp.gt.f32.partialorder %v1763, 0.0
    %vm1779 = vcmp.gt.f32.partialorder %v1305, 0.0
    %vm1780 = vcmp.gt.f32.partialorder %v1307, 0.0
    %vm1781 = vcmp.gt.f32.partialorder %v1459, 0.0
    %vm1782 = vcmp.gt.f32.partialorder %v1461, 0.0
    %vm1783 = vcmp.gt.f32.partialorder %v1613, 0.0
    %vm1784 = vcmp.gt.f32.partialorder %v1615, 0.0
    %vm1785 = vcmp.gt.f32.partialorder %v1767, 0.0
    %vm1786 = vcmp.gt.f32.partialorder %v1769, 0.0
    %v1787 = vmul.f32 %v1299, 0.2
    %v1788 = vmul.f32 %v1301, 0.2
    %v1789 = vmul.f32 %v1453, 0.2
    %v1790 = vmul.f32 %v1455, 0.2
    %v1791 = vmul.f32 %v1607, 0.2
    %v1792 = vmul.f32 %v1609, 0.2
    %v1793 = vmul.f32 %v1761, 0.2
    %v1794 = vmul.f32 %v1763, 0.2
    %v1795 = vmul.f32 %v1305, 0.2
    %v1796 = vmul.f32 %v1307, 0.2
    %v1797 = vmul.f32 %v1459, 0.2
    %v1798 = vmul.f32 %v1461, 0.2
    %v1799 = vmul.f32 %v1613, 0.2
    %v1800 = vmul.f32 %v1615, 0.2
    %v1801 = vmul.f32 %v1767, 0.2
    %v1802 = vmul.f32 %v1769, 0.2
    %v1803 = vsel %vm1771, %v1299, %v1787
    %v1804 = vsel %vm1772, %v1301, %v1788
    %v1805 = vsel %vm1773, %v1453, %v1789
    %v1806 = vsel %vm1774, %v1455, %v1790
    %v1807 = vsel %vm1775, %v1607, %v1791
    %v1808 = vsel %vm1776, %v1609, %v1792
    %v1809 = vsel %vm1777, %v1761, %v1793
    %v1810 = vsel %vm1778, %v1763, %v1794
    %v1811 = vsel %vm1779, %v1305, %v1795
    %v1812 = vsel %vm1780, %v1307, %v1796
    %v1813 = vsel %vm1781, %v1459, %v1797
    %v1814 = vsel %vm1782, %v1461, %v1798
    %v1815 = vsel %vm1783, %v1613, %v1799
    %v1816 = vsel %vm1784, %v1615, %v1800
    %v1817 = vsel %vm1785, %v1767, %v1801
    %v1818 = vsel %vm1786, %v1769, %v1802
    %v1819 = vld [vmem:[#allocation14] sm:$0xff]
    %v1820 = vld [vmem:[#allocation14 + $0x8] sm:$0xff]
    %v1821 = vld [vmem:[#allocation14 + $0x10] sm:$0xff]
    %v1822 = vld [vmem:[#allocation14 + $0x18] sm:$0xff]
    %v1823 = vld [vmem:[#allocation14 + $0x20] sm:$0xff]
    %v1824 = vld [vmem:[#allocation14 + $0x28] sm:$0xff]
    %v1825 = vld [vmem:[#allocation14 + $0x30] sm:$0xff]
    %v1826 = vld [vmem:[#allocation14 + $0x38] sm:$0xff]
    %v1827 = vld [vmem:[#allocation14 + $0x40] sm:$0xff]
    %v1828 = vld [vmem:[#allocation14 + $0x48] sm:$0xff]
    %v1829 = vld [vmem:[#allocation14 + $0x50] sm:$0xff]
    %v1830 = vld [vmem:[#allocation14 + $0x58] sm:$0xff]
    %v1831 = vld [vmem:[#allocation14 + $0x60] sm:$0xff]
    %v1832 = vld [vmem:[#allocation14 + $0x68] sm:$0xff]
    %v1833 = vld [vmem:[#allocation14 + $0x70] sm:$0xff]
    %v1834 = vld [vmem:[#allocation14 + $0x78] sm:$0xff]
    %v1835 = vld [vmem:[#allocation14 + $0x80] sm:$0xff]
    %v1836 = vld [vmem:[#allocation14 + $0x88] sm:$0xff]
    %v1837 = vld [vmem:[#allocation14 + $0x90] sm:$0xff]
    %v1838 = vld [vmem:[#allocation14 + $0x98] sm:$0xff]
    %v1839 = vld [vmem:[#allocation14 + $0xa0] sm:$0xff]
    %v1840 = vld [vmem:[#allocation14 + $0xa8] sm:$0xff]
    %v1841 = vld [vmem:[#allocation14 + $0xb0] sm:$0xff]
    %v1842 = vld [vmem:[#allocation14 + $0xb8] sm:$0xff]
    %v1843 = vld [vmem:[#allocation14 + $0xc0] sm:$0xff]
    %v1844 = vld [vmem:[#allocation14 + $0xc8] sm:$0xff]
    %v1845 = vld [vmem:[#allocation14 + $0xd0] sm:$0xff]
    %v1846 = vld [vmem:[#allocation14 + $0xd8] sm:$0xff]
    %v1847 = vld [vmem:[#allocation14 + $0xe0] sm:$0xff]
    %v1848 = vld [vmem:[#allocation14 + $0xe8] sm:$0xff]
    %v1849 = vld [vmem:[#allocation14 + $0xf0] sm:$0xff]
    %v1850 = vld [vmem:[#allocation14 + $0xf8] sm:$0xff]
    %v1851 = vld [vmem:[#allocation14 + $0x100] sm:$0xff]
    %v1852 = vld [vmem:[#allocation14 + $0x108] sm:$0xff]
    %v1853 = vld [vmem:[#allocation14 + $0x110] sm:$0xff]
    %v1854 = vld [vmem:[#allocation14 + $0x118] sm:$0xff]
    %v1855 = vld [vmem:[#allocation14 + $0x120] sm:$0xff]
    %v1856 = vld [vmem:[#allocation14 + $0x128] sm:$0xff]
    %v1857 = vld [vmem:[#allocation14 + $0x130] sm:$0xff]
    %v1858 = vld [vmem:[#allocation14 + $0x138] sm:$0xff]
    %v1859 = vld [vmem:[#allocation14 + $0x140] sm:$0xff]
    %v1860 = vld [vmem:[#allocation14 + $0x148] sm:$0xff]
    %v1861 = vld [vmem:[#allocation14 + $0x150] sm:$0xff]
    %v1862 = vld [vmem:[#allocation14 + $0x158] sm:$0xff]
    %v1863 = vld [vmem:[#allocation14 + $0x160] sm:$0xff]
    %v1864 = vld [vmem:[#allocation14 + $0x168] sm:$0xff]
    %v1865 = vld [vmem:[#allocation14 + $0x170] sm:$0xff]
    %v1866 = vld [vmem:[#allocation14 + $0x178] sm:$0xff]
    %v1867 = vld [vmem:[#allocation14 + $0x180] sm:$0xff]
    %v1868 = vld [vmem:[#allocation14 + $0x188] sm:$0xff]
    %v1869 = vld [vmem:[#allocation14 + $0x190] sm:$0xff]
    %v1870 = vld [vmem:[#allocation14 + $0x198] sm:$0xff]
    %v1871 = vld [vmem:[#allocation14 + $0x1a0] sm:$0xff]
    %v1872 = vld [vmem:[#allocation14 + $0x1a8] sm:$0xff]
    %v1873 = vld [vmem:[#allocation14 + $0x1b0] sm:$0xff]
    %v1874 = vld [vmem:[#allocation14 + $0x1b8] sm:$0xff]
    %v1875 = vld [vmem:[#allocation14 + $0x1c0] sm:$0xff]
    %v1876 = vld [vmem:[#allocation14 + $0x1c8] sm:$0xff]
    %v1877 = vld [vmem:[#allocation14 + $0x1d0] sm:$0xff]
    %v1878 = vld [vmem:[#allocation14 + $0x1d8] sm:$0xff]
    %v1879 = vld [vmem:[#allocation14 + $0x1e0] sm:$0xff]
    %v1880 = vld [vmem:[#allocation14 + $0x1e8] sm:$0xff]
    %v1881 = vld [vmem:[#allocation14 + $0x1f0] sm:$0xff]
    %v1882 = vld [vmem:[#allocation14 + $0x1f8] sm:$0xff]
    %v1883 = vld [vmem:[#allocation14 + $0x200] sm:$0xff]
    %v1884 = vld [vmem:[#allocation14 + $0x208] sm:$0xff]
    %v1885 = vld [vmem:[#allocation14 + $0x210] sm:$0xff]
    %v1886 = vld [vmem:[#allocation14 + $0x218] sm:$0xff]
    %v1887 = vld [vmem:[#allocation14 + $0x220] sm:$0xff]
    %v1888 = vld [vmem:[#allocation14 + $0x228] sm:$0xff]
    %v1889 = vld [vmem:[#allocation14 + $0x230] sm:$0xff]
    %v1890 = vld [vmem:[#allocation14 + $0x238] sm:$0xff]
    %v1891 = vld [vmem:[#allocation14 + $0x240] sm:$0xff]
    %v1892 = vld [vmem:[#allocation14 + $0x248] sm:$0xff]
    %v1893 = vld [vmem:[#allocation14 + $0x250] sm:$0xff]
    %v1894 = vld [vmem:[#allocation14 + $0x258] sm:$0xff]
    %v1895 = vld [vmem:[#allocation14 + $0x260] sm:$0xff]
    %v1896 = vld [vmem:[#allocation14 + $0x268] sm:$0xff]
    %v1897 = vld [vmem:[#allocation14 + $0x270] sm:$0xff]
    %v1898 = vld [vmem:[#allocation14 + $0x278] sm:$0xff]
    %v1899 = vld [vmem:[#allocation14 + $0x280] sm:$0xff]
    %v1900 = vld [vmem:[#allocation14 + $0x288] sm:$0xff]
    %v1901 = vld [vmem:[#allocation14 + $0x290] sm:$0xff]
    %v1902 = vld [vmem:[#allocation14 + $0x298] sm:$0xff]
    %v1903 = vld [vmem:[#allocation14 + $0x2a0] sm:$0xff]
    %v1904 = vld [vmem:[#allocation14 + $0x2a8] sm:$0xff]
    %v1905 = vld [vmem:[#allocation14 + $0x2b0] sm:$0xff]
    %v1906 = vld [vmem:[#allocation14 + $0x2b8] sm:$0xff]
    %v1907 = vld [vmem:[#allocation14 + $0x2c0] sm:$0xff]
    %v1908 = vld [vmem:[#allocation14 + $0x2c8] sm:$0xff]
    %v1909 = vld [vmem:[#allocation14 + $0x2d0] sm:$0xff]
    %v1910 = vld [vmem:[#allocation14 + $0x2d8] sm:$0xff]
    %v1911 = vld [vmem:[#allocation14 + $0x2e0] sm:$0xff]
    %v1912 = vld [vmem:[#allocation14 + $0x2e8] sm:$0xff]
    %v1913 = vld [vmem:[#allocation14 + $0x2f0] sm:$0xff]
    %v1914 = vld [vmem:[#allocation14 + $0x2f8] sm:$0xff]
    %v1915 = vld [vmem:[#allocation14 + $0x300] sm:$0xff]
    %v1916 = vld [vmem:[#allocation14 + $0x308] sm:$0xff]
    %v1917 = vld [vmem:[#allocation14 + $0x310] sm:$0xff]
    %v1918 = vld [vmem:[#allocation14 + $0x318] sm:$0xff]
    %v1919 = vld [vmem:[#allocation14 + $0x320] sm:$0xff]
    %v1920 = vld [vmem:[#allocation14 + $0x328] sm:$0xff]
    %v1921 = vld [vmem:[#allocation14 + $0x330] sm:$0xff]
    %v1922 = vld [vmem:[#allocation14 + $0x338] sm:$0xff]
    %v1923 = vld [vmem:[#allocation14 + $0x340] sm:$0xff]
    %v1924 = vld [vmem:[#allocation14 + $0x348] sm:$0xff]
    %v1925 = vld [vmem:[#allocation14 + $0x350] sm:$0xff]
    %v1926 = vld [vmem:[#allocation14 + $0x358] sm:$0xff]
    %v1927 = vld [vmem:[#allocation14 + $0x360] sm:$0xff]
    %v1928 = vld [vmem:[#allocation14 + $0x368] sm:$0xff]
    %v1929 = vld [vmem:[#allocation14 + $0x370] sm:$0xff]
    %v1930 = vld [vmem:[#allocation14 + $0x378] sm:$0xff]
    %v1931 = vld [vmem:[#allocation14 + $0x380] sm:$0xff]
    %v1932 = vld [vmem:[#allocation14 + $0x388] sm:$0xff]
    %v1933 = vld [vmem:[#allocation14 + $0x390] sm:$0xff]
    %v1934 = vld [vmem:[#allocation14 + $0x398] sm:$0xff]
    %v1935 = vld [vmem:[#allocation14 + $0x3a0] sm:$0xff]
    %v1936 = vld [vmem:[#allocation14 + $0x3a8] sm:$0xff]
    %v1937 = vld [vmem:[#allocation14 + $0x3b0] sm:$0xff]
    %v1938 = vld [vmem:[#allocation14 + $0x3b8] sm:$0xff]
    %v1939 = vld [vmem:[#allocation14 + $0x3c0] sm:$0xff]
    %v1940 = vld [vmem:[#allocation14 + $0x3c8] sm:$0xff]
    %v1941 = vld [vmem:[#allocation14 + $0x3d0] sm:$0xff]
    %v1942 = vld [vmem:[#allocation14 + $0x3d8] sm:$0xff]
    %v1943 = vld [vmem:[#allocation14 + $0x3e0] sm:$0xff]
    %v1944 = vld [vmem:[#allocation14 + $0x3e8] sm:$0xff]
    %v1945 = vld [vmem:[#allocation14 + $0x3f0] sm:$0xff]
    %v1946 = vld [vmem:[#allocation14 + $0x3f8] sm:$0xff]
    %v1947 = vld [vmem:[#allocation16] sm:$0x1]
    %v1949 = vlaneseq
    %v1950 = vshrl.u32 %v1949, 7
    %v1951 = vsub.s32 0, %v1950
    %v1952 = vrot.slane %v1947, %v1951
    %1954 = vmatprep.subr.mxu0 0.0
    %1955 = vmatpush1.msra.mxu0 %v1819
    %1956 = vmatprep.subr.mxu0 0.0
    %1957 = vmatpush1.msra.mxu0 %v1820
    %1958 = vmatprep.subr.mxu0 0.0
    %1959 = vmatpush1.msra.mxu0 %v1821
    %1960 = vmatprep.subr.mxu0 0.0
    %1961 = vmatpush1.msra.mxu0 %v1822
    %1962 = vmatprep.subr.mxu0 0.0
    %1963 = vmatpush1.msra.mxu0 %v1823
    %1964 = vmatprep.subr.mxu0 0.0
    %1965 = vmatpush1.msra.mxu0 %v1824
    %1966 = vmatprep.subr.mxu0 0.0
    %1967 = vmatpush1.msra.mxu0 %v1825
    %1968 = vmatprep.subr.mxu0 0.0
    %1969 = vmatpush1.msra.mxu0 %v1826
    %1970 = vmatprep.subr.mxu0 0.0
    %1971 = vmatpush1.msra.mxu0 %v1827
    %1972 = vmatprep.subr.mxu0 0.0
    %1973 = vmatpush1.msra.mxu0 %v1828
    %1974 = vmatprep.subr.mxu0 0.0
    %1975 = vmatpush1.msra.mxu0 %v1829
    %1976 = vmatprep.subr.mxu0 0.0
    %1977 = vmatpush1.msra.mxu0 %v1830
    %1978 = vmatprep.subr.mxu0 0.0
    %1979 = vmatpush1.msra.mxu0 %v1831
    %1980 = vmatprep.subr.mxu0 0.0
    %1981 = vmatpush1.msra.mxu0 %v1832
    %1982 = vmatprep.subr.mxu0 0.0
    %1983 = vmatpush1.msra.mxu0 %v1833
    %1984 = vmatprep.subr.mxu0 0.0
    %1985 = vmatpush1.msra.mxu0 %v1834
    %1986 = vmatprep.subr.mxu0 0.0
    %1987 = vmatpush1.msra.mxu0 %v1835
    %1988 = vmatprep.subr.mxu0 0.0
    %1989 = vmatpush1.msra.mxu0 %v1836
    %1990 = vmatprep.subr.mxu0 0.0
    %1991 = vmatpush1.msra.mxu0 %v1837
    %1992 = vmatprep.subr.mxu0 0.0
    %1993 = vmatpush1.msra.mxu0 %v1838
    %1994 = vmatprep.subr.mxu0 0.0
    %1995 = vmatpush1.msra.mxu0 %v1839
    %1996 = vmatprep.subr.mxu0 0.0
    %1997 = vmatpush1.msra.mxu0 %v1840
    %1998 = vmatprep.subr.mxu0 0.0
    %1999 = vmatpush1.msra.mxu0 %v1841
    %2000 = vmatprep.subr.mxu0 0.0
    %2001 = vmatpush1.msra.mxu0 %v1842
    %2002 = vmatprep.subr.mxu0 0.0
    %2003 = vmatpush1.msra.mxu0 %v1843
    %2004 = vmatprep.subr.mxu0 0.0
    %2005 = vmatpush1.msra.mxu0 %v1844
    %2006 = vmatprep.subr.mxu0 0.0
    %2007 = vmatpush1.msra.mxu0 %v1845
    %2008 = vmatprep.subr.mxu0 0.0
    %2009 = vmatpush1.msra.mxu0 %v1846
    %2010 = vmatprep.subr.mxu0 0.0
    %2011 = vmatpush1.msra.mxu0 %v1847
    %2012 = vmatprep.subr.mxu0 0.0
    %2013 = vmatpush1.msra.mxu0 %v1848
    %2014 = vmatprep.subr.mxu0 0.0
    %2015 = vmatpush1.msra.mxu0 %v1849
    %2016 = vmatprep.subr.mxu0 0.0
    %2017 = vmatpush1.msra.mxu0 %v1850
    %2018 = vmatprep.mubr.f32.mxu0 %v1804
    %2019 = vmatmul.mubr.f32.gmra.mrb[0].mxu0 %v1803
    %v2020 = vpop.f32.mrb[0].mxu0
    %v2021 = vadd.f32 %v1952, %v2020
    %v2022 = vpop.f32.mrb[0].mxu0
    %2023 = vmatprep.mubr.f32.mxu0 %v1812
    %2024 = vmatmul.mubr.f32.gmra.mrb[0].mxu0 %v1811
    %v2025 = vpop.f32.mrb[0].mxu0
    %v2026 = vadd.f32 %v1952, %v2025
    %v2027 = vpop.f32.mrb[0].mxu0
    %2028 = vdwg.mxu0
    %2029 = vmatprep.subr.mxu0 0.0
    %2030 = vmatpush1.msra.mxu0 %v1851
    %2031 = vmatprep.subr.mxu0 0.0
    %2032 = vmatpush1.msra.mxu0 %v1852
    %2033 = vmatprep.subr.mxu0 0.0
    %2034 = vmatpush1.msra.mxu0 %v1853
    %2035 = vmatprep.subr.mxu0 0.0
    %2036 = vmatpush1.msra.mxu0 %v1854
    %2037 = vmatprep.subr.mxu0 0.0
    %2038 = vmatpush1.msra.mxu0 %v1855
    %2039 = vmatprep.subr.mxu0 0.0
    %2040 = vmatpush1.msra.mxu0 %v1856
    %2041 = vmatprep.subr.mxu0 0.0
    %2042 = vmatpush1.msra.mxu0 %v1857
    %2043 = vmatprep.subr.mxu0 0.0
    %2044 = vmatpush1.msra.mxu0 %v1858
    %2045 = vmatprep.subr.mxu0 0.0
    %2046 = vmatpush1.msra.mxu0 %v1859
    %2047 = vmatprep.subr.mxu0 0.0
    %2048 = vmatpush1.msra.mxu0 %v1860
    %2049 = vmatprep.subr.mxu0 0.0
    %2050 = vmatpush1.msra.mxu0 %v1861
    %2051 = vmatprep.subr.mxu0 0.0
    %2052 = vmatpush1.msra.mxu0 %v1862
    %2053 = vmatprep.subr.mxu0 0.0
    %2054 = vmatpush1.msra.mxu0 %v1863
    %2055 = vmatprep.subr.mxu0 0.0
    %2056 = vmatpush1.msra.mxu0 %v1864
    %2057 = vmatprep.subr.mxu0 0.0
    %2058 = vmatpush1.msra.mxu0 %v1865
    %2059 = vmatprep.subr.mxu0 0.0
    %2060 = vmatpush1.msra.mxu0 %v1866
    %2061 = vmatprep.subr.mxu0 0.0
    %2062 = vmatpush1.msra.mxu0 %v1867
    %2063 = vmatprep.subr.mxu0 0.0
    %2064 = vmatpush1.msra.mxu0 %v1868
    %2065 = vmatprep.subr.mxu0 0.0
    %2066 = vmatpush1.msra.mxu0 %v1869
    %2067 = vmatprep.subr.mxu0 0.0
    %2068 = vmatpush1.msra.mxu0 %v1870
    %2069 = vmatprep.subr.mxu0 0.0
    %2070 = vmatpush1.msra.mxu0 %v1871
    %2071 = vmatprep.subr.mxu0 0.0
    %2072 = vmatpush1.msra.mxu0 %v1872
    %2073 = vmatprep.subr.mxu0 0.0
    %2074 = vmatpush1.msra.mxu0 %v1873
    %2075 = vmatprep.subr.mxu0 0.0
    %2076 = vmatpush1.msra.mxu0 %v1874
    %2077 = vmatprep.subr.mxu0 0.0
    %2078 = vmatpush1.msra.mxu0 %v1875
    %2079 = vmatprep.subr.mxu0 0.0
    %2080 = vmatpush1.msra.mxu0 %v1876
    %2081 = vmatprep.subr.mxu0 0.0
    %2082 = vmatpush1.msra.mxu0 %v1877
    %2083 = vmatprep.subr.mxu0 0.0
    %2084 = vmatpush1.msra.mxu0 %v1878
    %2085 = vmatprep.subr.mxu0 0.0
    %2086 = vmatpush1.msra.mxu0 %v1879
    %2087 = vmatprep.subr.mxu0 0.0
    %2088 = vmatpush1.msra.mxu0 %v1880
    %2089 = vmatprep.subr.mxu0 0.0
    %2090 = vmatpush1.msra.mxu0 %v1881
    %2091 = vmatprep.subr.mxu0 0.0
    %2092 = vmatpush1.msra.mxu0 %v1882
    %2093 = vmatprep.mubr.f32.mxu0 %v1806
    %2094 = vmatmul.mubr.f32.gmra.mrb[0].mxu0 %v1805
    %v2095 = vpop.f32.mrb[0].mxu0
    %v2096 = vadd.f32 %v2021, %v2095
    %v2097 = vpop.f32.mrb[0].mxu0
    %2098 = vmatprep.mubr.f32.mxu0 %v1814
    %2099 = vmatmul.mubr.f32.gmra.mrb[0].mxu0 %v1813
    %v2100 = vpop.f32.mrb[0].mxu0
    %v2101 = vadd.f32 %v2026, %v2100
    %v2102 = vpop.f32.mrb[0].mxu0
    %2103 = vdwg.mxu0
    %2104 = vmatprep.subr.mxu0 0.0
    %2105 = vmatpush1.msra.mxu0 %v1883
    %2106 = vmatprep.subr.mxu0 0.0
    %2107 = vmatpush1.msra.mxu0 %v1884
    %2108 = vmatprep.subr.mxu0 0.0
    %2109 = vmatpush1.msra.mxu0 %v1885
    %2110 = vmatprep.subr.mxu0 0.0
    %2111 = vmatpush1.msra.mxu0 %v1886
    %2112 = vmatprep.subr.mxu0 0.0
    %2113 = vmatpush1.msra.mxu0 %v1887
    %2114 = vmatprep.subr.mxu0 0.0
    %2115 = vmatpush1.msra.mxu0 %v1888
    %2116 = vmatprep.subr.mxu0 0.0
    %2117 = vmatpush1.msra.mxu0 %v1889
    %2118 = vmatprep.subr.mxu0 0.0
    %2119 = vmatpush1.msra.mxu0 %v1890
    %2120 = vmatprep.subr.mxu0 0.0
    %2121 = vmatpush1.msra.mxu0 %v1891
    %2122 = vmatprep.subr.mxu0 0.0
    %2123 = vmatpush1.msra.mxu0 %v1892
    %2124 = vmatprep.subr.mxu0 0.0
    %2125 = vmatpush1.msra.mxu0 %v1893
    %2126 = vmatprep.subr.mxu0 0.0
    %2127 = vmatpush1.msra.mxu0 %v1894
    %2128 = vmatprep.subr.mxu0 0.0
    %2129 = vmatpush1.msra.mxu0 %v1895
    %2130 = vmatprep.subr.mxu0 0.0
    %2131 = vmatpush1.msra.mxu0 %v1896
    %2132 = vmatprep.subr.mxu0 0.0
    %2133 = vmatpush1.msra.mxu0 %v1897
    %2134 = vmatprep.subr.mxu0 0.0
    %2135 = vmatpush1.msra.mxu0 %v1898
    %2136 = vmatprep.subr.mxu0 0.0
    %2137 = vmatpush1.msra.mxu0 %v1899
    %2138 = vmatprep.subr.mxu0 0.0
    %2139 = vmatpush1.msra.mxu0 %v1900
    %2140 = vmatprep.subr.mxu0 0.0
    %2141 = vmatpush1.msra.mxu0 %v1901
    %2142 = vmatprep.subr.mxu0 0.0
    %2143 = vmatpush1.msra.mxu0 %v1902
    %2144 = vmatprep.subr.mxu0 0.0
    %2145 = vmatpush1.msra.mxu0 %v1903
    %2146 = vmatprep.subr.mxu0 0.0
    %2147 = vmatpush1.msra.mxu0 %v1904
    %2148 = vmatprep.subr.mxu0 0.0
    %2149 = vmatpush1.msra.mxu0 %v1905
    %2150 = vmatprep.subr.mxu0 0.0
    %2151 = vmatpush1.msra.mxu0 %v1906
    %2152 = vmatprep.subr.mxu0 0.0
    %2153 = vmatpush1.msra.mxu0 %v1907
    %2154 = vmatprep.subr.mxu0 0.0
    %2155 = vmatpush1.msra.mxu0 %v1908
    %2156 = vmatprep.subr.mxu0 0.0
    %2157 = vmatpush1.msra.mxu0 %v1909
    %2158 = vmatprep.subr.mxu0 0.0
    %2159 = vmatpush1.msra.mxu0 %v1910
    %2160 = vmatprep.subr.mxu0 0.0
    %2161 = vmatpush1.msra.mxu0 %v1911
    %2162 = vmatprep.subr.mxu0 0.0
    %2163 = vmatpush1.msra.mxu0 %v1912
    %2164 = vmatprep.subr.mxu0 0.0
    %2165 = vmatpush1.msra.mxu0 %v1913
    %2166 = vmatprep.subr.mxu0 0.0
    %2167 = vmatpush1.msra.mxu0 %v1914
    %2168 = vmatprep.mubr.f32.mxu0 %v1808
    %2169 = vmatmul.mubr.f32.gmra.mrb[0].mxu0 %v1807
    %v2170 = vpop.f32.mrb[0].mxu0
    %v2171 = vadd.f32 %v2096, %v2170
    %v2172 = vpop.f32.mrb[0].mxu0
    %2173 = vmatprep.mubr.f32.mxu0 %v1816
    %2174 = vmatmul.mubr.f32.gmra.mrb[0].mxu0 %v1815
    %v2175 = vpop.f32.mrb[0].mxu0
    %v2176 = vadd.f32 %v2101, %v2175
    %v2177 = vpop.f32.mrb[0].mxu0
    %2178 = vdwg.mxu0
    %2179 = vmatprep.subr.mxu0 0.0
    %2180 = vmatpush1.msra.mxu0 %v1915
    %2181 = vmatprep.subr.mxu0 0.0
    %2182 = vmatpush1.msra.mxu0 %v1916
    %2183 = vmatprep.subr.mxu0 0.0
    %2184 = vmatpush1.msra.mxu0 %v1917
    %2185 = vmatprep.subr.mxu0 0.0
    %2186 = vmatpush1.msra.mxu0 %v1918
    %2187 = vmatprep.subr.mxu0 0.0
    %2188 = vmatpush1.msra.mxu0 %v1919
    %2189 = vmatprep.subr.mxu0 0.0
    %2190 = vmatpush1.msra.mxu0 %v1920
    %2191 = vmatprep.subr.mxu0 0.0
    %2192 = vmatpush1.msra.mxu0 %v1921
    %2193 = vmatprep.subr.mxu0 0.0
    %2194 = vmatpush1.msra.mxu0 %v1922
    %2195 = vmatprep.subr.mxu0 0.0
    %2196 = vmatpush1.msra.mxu0 %v1923
    %2197 = vmatprep.subr.mxu0 0.0
    %2198 = vmatpush1.msra.mxu0 %v1924
    %2199 = vmatprep.subr.mxu0 0.0
    %2200 = vmatpush1.msra.mxu0 %v1925
    %2201 = vmatprep.subr.mxu0 0.0
    %2202 = vmatpush1.msra.mxu0 %v1926
    %2203 = vmatprep.subr.mxu0 0.0
    %2204 = vmatpush1.msra.mxu0 %v1927
    %2205 = vmatprep.subr.mxu0 0.0
    %2206 = vmatpush1.msra.mxu0 %v1928
    %2207 = vmatprep.subr.mxu0 0.0
    %2208 = vmatpush1.msra.mxu0 %v1929
    %2209 = vmatprep.subr.mxu0 0.0
    %2210 = vmatpush1.msra.mxu0 %v1930
    %2211 = vmatprep.subr.mxu0 0.0
    %2212 = vmatpush1.msra.mxu0 %v1931
    %2213 = vmatprep.subr.mxu0 0.0
    %2214 = vmatpush1.msra.mxu0 %v1932
    %2215 = vmatprep.subr.mxu0 0.0
    %2216 = vmatpush1.msra.mxu0 %v1933
    %2217 = vmatprep.subr.mxu0 0.0
    %2218 = vmatpush1.msra.mxu0 %v1934
    %2219 = vmatprep.subr.mxu0 0.0
    %2220 = vmatpush1.msra.mxu0 %v1935
    %2221 = vmatprep.subr.mxu0 0.0
    %2222 = vmatpush1.msra.mxu0 %v1936
    %2223 = vmatprep.subr.mxu0 0.0
    %2224 = vmatpush1.msra.mxu0 %v1937
    %2225 = vmatprep.subr.mxu0 0.0
    %2226 = vmatpush1.msra.mxu0 %v1938
    %2227 = vmatprep.subr.mxu0 0.0
    %2228 = vmatpush1.msra.mxu0 %v1939
    %2229 = vmatprep.subr.mxu0 0.0
    %2230 = vmatpush1.msra.mxu0 %v1940
    %2231 = vmatprep.subr.mxu0 0.0
    %2232 = vmatpush1.msra.mxu0 %v1941
    %2233 = vmatprep.subr.mxu0 0.0
    %2234 = vmatpush1.msra.mxu0 %v1942
    %2235 = vmatprep.subr.mxu0 0.0
    %2236 = vmatpush1.msra.mxu0 %v1943
    %2237 = vmatprep.subr.mxu0 0.0
    %2238 = vmatpush1.msra.mxu0 %v1944
    %2239 = vmatprep.subr.mxu0 0.0
    %2240 = vmatpush1.msra.mxu0 %v1945
    %2241 = vmatprep.subr.mxu0 0.0
    %2242 = vmatpush1.msra.mxu0 %v1946
    %2243 = vmatprep.mubr.f32.mxu0 %v1810
    %2244 = vmatmul.mubr.f32.gmra.mrb[0].mxu0 %v1809
    %v2245 = vpop.f32.mrb[0].mxu0
    %v2246 = vadd.f32 %v2171, %v2245
    %v2247 = vpop.f32.mrb[0].mxu0
    %2248 = vmatprep.mubr.f32.mxu0 %v1818
    %2249 = vmatmul.mubr.f32.gmra.mrb[0].mxu0 %v1817
    %v2250 = vpop.f32.mrb[0].mxu0
    %v2251 = vadd.f32 %v2176, %v2250
    %v2252 = vpop.f32.mrb[0].mxu0
    %2253 = vdwg.mxu0
    %v2254 = vtanh.pop %v2246
    %v2255 = vtanh.pop %v2251
    %2256 = vst [vmem:[#allocation17] sm:$0xff] %v2254
    %2257 = vst [vmem:[#allocation17 + $0x8] sm:$0xff] %v2255
    // Predicated region
    $region74: #{tpu_custom_call.1} parent=1 // pred_check
      _
    $region75: #{tpu_custom_call.1} parent=1 // pred_check_branch
      %2259 = sbr.rel (0) target = $region77
    $region76: #{tpu_custom_call.1} parent=1 // pred_region
      %s2261 = ssub.s32 256, 256
      %2262 = vsyncadd [#allocation4], %s2261
      %s2263 = sshll.u32 [#allocation17], 4
      %s2264 = int_to_ptr.vmem [resolvable:$true] %s2263
      %2269 = dma.vmem_to_hbm [thread:$0]  %s2264, 256, %s9, [#allocation4], 128, 128, 8
    $region77: #{tpu_custom_call.1} parent=1 // pred_fallthru
      _
    // Predicated region
    $region78: #{tpu_custom_call.1} parent=1 // pred_check
      _
    $region79: #{tpu_custom_call.1} parent=1 // pred_check_branch
      %2271 = sbr.rel (0) target = $region81
    $region80: #{tpu_custom_call.1} parent=1 // pred_region
      %2272 = dma.done [#allocation4], 256
    $region81: #{tpu_custom_call.1} parent=1 // pred_fallthru
      _
    %2273 = vsyncpa [#allocation3], 1
    %2274 = vsyncpa [#allocation6], 1
    %2275 = vsyncpa [#allocation9], 1
    %2276 = vsyncpa [#allocation12], 1
    %2277 = vsyncpa [#allocation15], 1
    %2278 = vsyncpa [#allocation4], 1

</llo_original>
